<compile_context>
chip_gen: v7x
topology: tpu7x:2x2x1
jax: 0.10.0
libtpu: 0.0.40
codegen_flags: <defaults>
</compile_context>

<pallas_src>
import functools

import jax
import jax.numpy as jnp
from jax.experimental import pallas as pl
from jax.experimental.pallas import tpu as pltpu

# ---------------- model hyper-parameters (small synthetic sizes) -------------
N_NODES   = 64
NODE_F    = 32
N_HIDDEN  = 16
N_HEADS   = 2
N_LAYERS  = 2
N_CLASSES = 8
NEG_SLOPE = 0.2
BN_EPS    = 1e-5
HF        = N_HEADS * N_HIDDEN
MASK_NEG  = -1e30


def _vmem():
    return pl.BlockSpec(memory_space=pltpu.MemorySpace.VMEM)


# ---------------------------- fused Pallas kernel -----------------------------
def fused_gat_kernel(x_ref, adj_t_ref, *refs, n_layers, n_heads, out_feats):
    """Full GAT forward: n_layers x (GATConv + folded-BN + ReLU) + pred_linear.

    x:      (N, Din)   node features
    adj_t:  (N, N)     adj_t[d, s] = 1.0 iff edge s -> d
    refs:   [w_src, w_dst, b_dst, w_attn] * n_layers, w_pred, b_pred,
            out_ref (N, C), h_scratch (N, H*F) VMEM
    Per-layer params have eval-BatchNorm folded in (see fold_bn below);
    w_attn = [w_attn_src | w_attn_dst] of shape (Din, 2H).
    """
    layer_refs = refs[:4 * n_layers]
    w_pred_ref, b_pred_ref, out_ref, h_ref = refs[4 * n_layers:]

    # Additive edge mask, computed once and shared by every layer.
    edge_bias = jnp.where(adj_t_ref[...] > 0.0, 0.0, MASK_NEG)          # (N, N) f32

    def gat_layer(x, w_src_ref, w_dst_ref, b_dst_ref, w_attn_ref, out_buf):
        x_bf = x.astype(jnp.bfloat16)
        # Linear projections on the MXU (bf16 operands, f32 accumulation).
        fsrc = jnp.dot(x_bf, w_src_ref[...],
                       preferred_element_type=jnp.float32)              # (N, H*F)
        fdst = jnp.dot(x_bf, w_dst_ref[...],
                       preferred_element_type=jnp.float32) + b_dst_ref[...]
        fsrc_bf = fsrc.astype(jnp.bfloat16)

        # Attention logits stay in f32 (tiny matmul, keeps softmax drift low).
        attn = jnp.dot(x, w_attn_ref[...],
                       preferred_element_type=jnp.float32)              # (N, 2H)
        attn_t = attn.T                                                 # (2H, N), XLU

        for h in range(n_heads):
            # e[d, s] = attn_dst[d, h] + attn_src[s, h]
            e = attn[:, n_heads + h:n_heads + h + 1] + attn_t[h:h + 1, :]   # (N, N)
            e = jnp.where(e >= 0.0, e, NEG_SLOPE * e)                   # LeakyReLU
            e = e + edge_bias                                           # mask non-edges
            m = jnp.max(e, axis=-1, keepdims=True)
            p = jnp.exp(e - m)                # masked entries underflow to exactly 0
            a = p * pl.reciprocal(jnp.sum(p, axis=-1, keepdims=True), approx=True)
            sl = slice(h * out_feats, (h + 1) * out_feats)
            agg = jnp.dot(a.astype(jnp.bfloat16), fsrc_bf[:, sl],
                          preferred_element_type=jnp.float32)           # (N, F)
            # BN already folded into the weights; dst residual + ReLU, written
            # straight into the lane slice of the VMEM scratch (no concat).
            out_buf[:, sl] = jnp.maximum(agg + fdst[:, sl], 0.0)

    # Layer 0 reads the HBM-provided features; later layers read the VMEM scratch.
    gat_layer(x_ref[...], *layer_refs[0:4], h_ref)
    for l in range(1, n_layers):
        gat_layer(h_ref[...], *layer_refs[4 * l:4 * l + 4], h_ref)

    # Prediction head: only this (N, C) result ever leaves VMEM.
    out_ref[...] = (jnp.dot(h_ref[...], w_pred_ref[...],
                            preferred_element_type=jnp.float32) + b_pred_ref[...])


# ------------------------------ wrappers --------------------------------------
def fold_bn(p):
    """Fold eval-mode BatchNorm1d into the GATConv linears (valid because the
    edge softmax is invariant to per-output-column scaling of fsrc/fdst)."""
    scale = p["gamma"] * jax.lax.rsqrt(p["var"] + BN_EPS)               # (1, HF)
    shift = p["beta"] - p["mean"] * scale
    w_src = (p["w_src"] * scale).astype(jnp.bfloat16)                   # (Din, HF)
    w_dst = (p["w_dst"] * scale).astype(jnp.bfloat16)                   # (Din, HF)
    b_dst = p["b_dst"] * scale + shift                                  # (1, HF) f32
    w_attn = jnp.concatenate([p["w_asrc"], p["w_adst"]], axis=1)        # (Din, 2H)
    return w_src, w_dst, b_dst, w_attn


@jax.jit
def gat_forward(x, adj_t, layer_params, w_pred, b_pred):
    n = x.shape[0]
    flat = []
    for p in layer_params:
        flat.extend(fold_bn(p))
    kern = functools.partial(fused_gat_kernel, n_layers=len(layer_params),
                             n_heads=N_HEADS, out_feats=N_HIDDEN)
    return pl.pallas_call(
        kern,
        out_shape=jax.ShapeDtypeStruct((n, w_pred.shape[1]), jnp.float32),
        in_specs=[_vmem()] * (2 + len(flat) + 2),
        out_specs=_vmem(),
        scratch_shapes=[pltpu.VMEM((n, HF), jnp.float32)],
        compiler_params=pltpu.CompilerParams(vmem_limit_bytes=32 * 1024 * 1024),
    )(x, adj_t, *flat, w_pred, b_pred)


# ------------------------- parameter initialization ---------------------------
def xavier_normal(key, in_dim, out_dim, gain):
    std = gain * (2.0 / (in_dim + out_dim)) ** 0.5
    return std * jax.random.normal(key, (in_dim, out_dim), jnp.float32)


def init_layer(keys, in_dim):
    gain = 2.0 ** 0.5  # calculate_gain('relu')
    k = iter(keys)
    bound = 1.0 / (in_dim ** 0.5)
    return {
        "w_src":  xavier_normal(next(k), in_dim, HF, gain),             # (Din, H*F)
        "w_dst":  xavier_normal(next(k), in_dim, HF, gain),             # (Din, H*F)
        "b_dst":  jax.random.uniform(next(k), (1, HF), jnp.float32, -bound, bound),
        "w_asrc": xavier_normal(next(k), in_dim, N_HEADS, gain),        # (Din, H)
        "w_adst": xavier_normal(next(k), in_dim, N_HEADS, gain),        # (Din, H)
        "gamma":  jnp.ones((1, HF), jnp.float32),
        "beta":   jnp.zeros((1, HF), jnp.float32),
        "mean":   0.1 * jax.random.normal(next(k), (1, HF), jnp.float32),
        "var":    1.0 + 0.1 * jax.random.uniform(next(k), (1, HF), jnp.float32),
    }


# ---------------------------- pure-JAX reference -------------------------------
def gat_layer_ref(x, adj_t, p):
    hp = jax.lax.Precision.HIGHEST
    fsrc = jnp.dot(x, p["w_src"], precision=hp)
    fdst = jnp.dot(x, p["w_dst"], precision=hp) + p["b_dst"]
    asrc = jnp.dot(x, p["w_asrc"], precision=hp)
    adst = jnp.dot(x, p["w_adst"], precision=hp)
    mask = adj_t > 0.5
    outs = []
    for h in range(N_HEADS):
        e = adst[:, h:h + 1] + asrc[:, h][None, :]
        e = jnp.where(e >= 0.0, e, NEG_SLOPE * e)
        e = jnp.where(mask, e, MASK_NEG)
        m = jnp.max(e, axis=-1, keepdims=True)
        pr = jnp.where(mask, jnp.exp(e - m), 0.0)
        a = pr / jnp.sum(pr, axis=-1, keepdims=True)
        outs.append(jnp.dot(a, fsrc[:, h * N_HIDDEN:(h + 1) * N_HIDDEN], precision=hp))
    rst = jnp.concatenate(outs, axis=-1) + fdst
    y = (rst - p["mean"]) * jax.lax.rsqrt(p["var"] + BN_EPS) * p["gamma"] + p["beta"]
    return jnp.maximum(y, 0.0)


def gat_forward_ref(x, adj_t, layer_params, w_pred, b_pred):
    h = x
    for p in layer_params:
        h = gat_layer_ref(h, adj_t, p)
    return jnp.dot(h, w_pred, precision=jax.lax.Precision.HIGHEST) + b_pred


# ----------------------------------- main --------------------------------------
if __name__ == "__main__":
    root = jax.random.PRNGKey(0)
    keys = jax.random.split(root, 4 + 8 * N_LAYERS)
    ki = iter(keys)

    # Node features (N, NODE_F)
    feat = jax.random.normal(next(ki), (N_NODES, NODE_F), jnp.float32)

    # Random sparse directed graph with self-loops (so in-degree >= 1).
    adj = jax.random.bernoulli(next(ki), 0.25, (N_NODES, N_NODES)).astype(jnp.float32)
    adj = jnp.maximum(adj, jnp.eye(N_NODES, dtype=jnp.float32))   # adj[s, d]
    adj_t = adj.T                                                 # adj_t[d, s]

    # Per-layer parameters.
    layer_params = []
    for i in range(N_LAYERS):
        in_dim = NODE_F if i == 0 else HF
        layer_params.append(init_layer([next(ki) for _ in range(8)], in_dim))

    # Prediction head.
    bound = 1.0 / (HF ** 0.5)
    w_pred = jax.random.uniform(next(ki), (HF, N_CLASSES), jnp.float32, -bound, bound)
    b_pred = jax.random.uniform(next(ki), (1, N_CLASSES), jnp.float32, -bound, bound)

    out = gat_forward(feat, adj_t, layer_params, w_pred, b_pred)
    out = jax.block_until_ready(out)

    ref = gat_forward_ref(feat, adj_t, layer_params, w_pred, b_pred)
    ref = jax.block_until_ready(ref)

    # Kernel uses bf16 MXU operands + approx reciprocal; reference is f32 HIGHEST,
    # so allow a correspondingly looser (but still structure-revealing) tolerance.
    if not jnp.allclose(out, ref, rtol=5e-2, atol=5e-2):
        max_err = float(jnp.max(jnp.abs(out - ref)))
        raise AssertionError(f"Pallas GAT mismatch vs reference, max abs err {max_err}")

    print("KERNEL_OK")
</pallas_src>

<mosaic_0001>
module attributes {stable_mosaic.version = 11 : i64} {
  func.func @fused_gat_kernel(%arg0: memref<64x32xf32, #tpu.memory_space<vmem>>, %arg1: memref<64x64xf32, #tpu.memory_space<vmem>>, %arg2: memref<32x32xbf16, #tpu.memory_space<vmem>>, %arg3: memref<32x32xbf16, #tpu.memory_space<vmem>>, %arg4: memref<1x32xf32, #tpu.memory_space<vmem>>, %arg5: memref<32x4xf32, #tpu.memory_space<vmem>>, %arg6: memref<32x32xbf16, #tpu.memory_space<vmem>>, %arg7: memref<32x32xbf16, #tpu.memory_space<vmem>>, %arg8: memref<1x32xf32, #tpu.memory_space<vmem>>, %arg9: memref<32x4xf32, #tpu.memory_space<vmem>>, %arg10: memref<32x8xf32, #tpu.memory_space<vmem>>, %arg11: memref<1x8xf32, #tpu.memory_space<vmem>>, %arg12: memref<64x8xf32, #tpu.memory_space<vmem>>, %arg13: memref<64x32xf32, #tpu.memory_space<vmem>>) attributes {dimension_semantics = [], scalar_prefetch = 0 : i64, scratch_operands = 1 : i64, tpu.core_type = #tpu.core_type<tc>} {
    %c0 = arith.constant 0 : index
    %c0_0 = arith.constant 0 : index
    %0 = vector.load %arg1[%c0, %c0_0] : memref<64x64xf32, #tpu.memory_space<vmem>>, vector<64x64xf32>
    %cst = arith.constant 0.000000e+00 : f32
    %1 = vector.broadcast %cst : f32 to vector<64x64xf32>
    %2 = arith.cmpf ogt, %0, %1 : vector<64x64xf32>
    %cst_1 = arith.constant 0.000000e+00 : f32
    %cst_2 = arith.constant -1.000000e+30 : f32
    %3 = vector.broadcast %cst_1 : f32 to vector<64x64xf32>
    %4 = vector.broadcast %cst_2 : f32 to vector<64x64xf32>
    %5 = arith.select %2, %3, %4 : vector<64x64xi1>, vector<64x64xf32>
    %c0_3 = arith.constant 0 : index
    %c0_4 = arith.constant 0 : index
    %6 = vector.load %arg0[%c0_3, %c0_4] : memref<64x32xf32, #tpu.memory_space<vmem>>, vector<64x32xf32>
    %7 = arith.truncf %6 : vector<64x32xf32> to vector<64x32xbf16>
    %c0_5 = arith.constant 0 : index
    %c0_6 = arith.constant 0 : index
    %8 = vector.load %arg2[%c0_5, %c0_6] : memref<32x32xbf16, #tpu.memory_space<vmem>>, vector<32x32xbf16>
    %cst_7 = arith.constant dense<0.000000e+00> : vector<64x32xf32>
    %9 = tpu.matmul %7, %8, %cst_7 {dimension_numbers = #tpu.dot_dimension_numbers<[1], [0], [0], [1], [0, 0, 1, 1], [], []>} : vector<64x32xbf16>, vector<32x32xbf16>, vector<64x32xf32> -> vector<64x32xf32>
    %c0_8 = arith.constant 0 : index
    %c0_9 = arith.constant 0 : index
    %10 = vector.load %arg3[%c0_8, %c0_9] : memref<32x32xbf16, #tpu.memory_space<vmem>>, vector<32x32xbf16>
    %cst_10 = arith.constant dense<0.000000e+00> : vector<64x32xf32>
    %11 = tpu.matmul %7, %10, %cst_10 {dimension_numbers = #tpu.dot_dimension_numbers<[1], [0], [0], [1], [0, 0, 1, 1], [], []>} : vector<64x32xbf16>, vector<32x32xbf16>, vector<64x32xf32> -> vector<64x32xf32>
    %c0_11 = arith.constant 0 : index
    %c0_12 = arith.constant 0 : index
    %12 = vector.load %arg4[%c0_11, %c0_12] : memref<1x32xf32, #tpu.memory_space<vmem>>, vector<1x32xf32>
    %13 = vector.broadcast %12 : vector<1x32xf32> to vector<64x32xf32>
    %14 = arith.addf %11, %13 : vector<64x32xf32>
    %15 = arith.truncf %9 : vector<64x32xf32> to vector<64x32xbf16>
    %c0_13 = arith.constant 0 : index
    %c0_14 = arith.constant 0 : index
    %16 = vector.load %arg5[%c0_13, %c0_14] : memref<32x4xf32, #tpu.memory_space<vmem>>, vector<32x4xf32>
    %cst_15 = arith.constant dense<0.000000e+00> : vector<64x4xf32>
    %17 = tpu.matmul %6, %16, %cst_15 {dimension_numbers = #tpu.dot_dimension_numbers<[1], [0], [0], [1], [0, 0, 1, 1], [], []>} : vector<64x32xf32>, vector<32x4xf32>, vector<64x4xf32> -> vector<64x4xf32>
    %18 = tpu.transpose %17, [1, 0] : vector<64x4xf32> -> vector<4x64xf32>
    %19 = vector.extract_strided_slice %17 {offsets = [0, 2], sizes = [64, 1], strides = [1, 1]} : vector<64x4xf32> to vector<64x1xf32>
    %20 = vector.extract_strided_slice %18 {offsets = [0, 0], sizes = [1, 64], strides = [1, 1]} : vector<4x64xf32> to vector<1x64xf32>
    %21 = vector.broadcast %19 : vector<64x1xf32> to vector<64x64xf32>
    %22 = vector.broadcast %20 : vector<1x64xf32> to vector<64x64xf32>
    %23 = arith.addf %21, %22 : vector<64x64xf32>
    %cst_16 = arith.constant 0.000000e+00 : f32
    %24 = vector.broadcast %cst_16 : f32 to vector<64x64xf32>
    %25 = arith.cmpf oge, %23, %24 : vector<64x64xf32>
    %cst_17 = arith.constant 2.000000e-01 : f32
    %26 = vector.broadcast %cst_17 : f32 to vector<64x64xf32>
    %27 = arith.mulf %26, %23 : vector<64x64xf32>
    %28 = arith.select %25, %23, %27 : vector<64x64xi1>, vector<64x64xf32>
    %29 = arith.addf %28, %5 : vector<64x64xf32>
    %cst_18 = arith.constant dense<0xFF800000> : vector<64xf32>
    %30 = vector.multi_reduction <maximumf>, %29, %cst_18 [1] : vector<64x64xf32> to vector<64xf32>
    %31 = vector.shape_cast %30 : vector<64xf32> to vector<64x1xf32>
    %32 = vector.broadcast %31 : vector<64x1xf32> to vector<64x64xf32>
    %33 = arith.subf %29, %32 : vector<64x64xf32>
    %34 = math.exp %33 : vector<64x64xf32>
    %cst_19 = arith.constant dense<0.000000e+00> : vector<64xf32>
    %35 = vector.multi_reduction <add>, %34, %cst_19 [1] : vector<64x64xf32> to vector<64xf32>
    %36 = vector.shape_cast %35 : vector<64xf32> to vector<64x1xf32>
    %37 = tpu.reciprocal %36 {approx = true} : vector<64x1xf32> -> vector<64x1xf32>
    %38 = vector.broadcast %37 : vector<64x1xf32> to vector<64x64xf32>
    %39 = arith.mulf %34, %38 : vector<64x64xf32>
    %40 = arith.truncf %39 : vector<64x64xf32> to vector<64x64xbf16>
    %41 = vector.extract_strided_slice %15 {offsets = [0, 0], sizes = [64, 16], strides = [1, 1]} : vector<64x32xbf16> to vector<64x16xbf16>
    %cst_20 = arith.constant dense<0.000000e+00> : vector<64x16xf32>
    %42 = tpu.matmul %40, %41, %cst_20 {dimension_numbers = #tpu.dot_dimension_numbers<[1], [0], [0], [1], [0, 0, 1, 1], [], []>} : vector<64x64xbf16>, vector<64x16xbf16>, vector<64x16xf32> -> vector<64x16xf32>
    %43 = vector.extract_strided_slice %14 {offsets = [0, 0], sizes = [64, 16], strides = [1, 1]} : vector<64x32xf32> to vector<64x16xf32>
    %44 = arith.addf %42, %43 : vector<64x16xf32>
    %cst_21 = arith.constant 0.000000e+00 : f32
    %45 = vector.broadcast %cst_21 : f32 to vector<64x16xf32>
    %46 = arith.maximumf %44, %45 : vector<64x16xf32>
    %c0_22 = arith.constant 0 : index
    %c0_23 = arith.constant 0 : index
    %47 = vector.load %arg13[%c0_22, %c0_23] : memref<64x32xf32, #tpu.memory_space<vmem>>, vector<64x16xf32>
    tpu.vector_store %arg13[%c0_22, %c0_23], %46 {strides = array<i32>} : memref<64x32xf32, #tpu.memory_space<vmem>>, vector<64x16xf32>,
    %48 = vector.extract_strided_slice %17 {offsets = [0, 3], sizes = [64, 1], strides = [1, 1]} : vector<64x4xf32> to vector<64x1xf32>
    %49 = vector.extract_strided_slice %18 {offsets = [1, 0], sizes = [1, 64], strides = [1, 1]} : vector<4x64xf32> to vector<1x64xf32>
    %50 = vector.broadcast %48 : vector<64x1xf32> to vector<64x64xf32>
    %51 = vector.broadcast %49 : vector<1x64xf32> to vector<64x64xf32>
    %52 = arith.addf %50, %51 : vector<64x64xf32>
    %cst_24 = arith.constant 0.000000e+00 : f32
    %53 = vector.broadcast %cst_24 : f32 to vector<64x64xf32>
    %54 = arith.cmpf oge, %52, %53 : vector<64x64xf32>
    %cst_25 = arith.constant 2.000000e-01 : f32
    %55 = vector.broadcast %cst_25 : f32 to vector<64x64xf32>
    %56 = arith.mulf %55, %52 : vector<64x64xf32>
    %57 = arith.select %54, %52, %56 : vector<64x64xi1>, vector<64x64xf32>
    %58 = arith.addf %57, %5 : vector<64x64xf32>
    %cst_26 = arith.constant dense<0xFF800000> : vector<64xf32>
    %59 = vector.multi_reduction <maximumf>, %58, %cst_26 [1] : vector<64x64xf32> to vector<64xf32>
    %60 = vector.shape_cast %59 : vector<64xf32> to vector<64x1xf32>
    %61 = vector.broadcast %60 : vector<64x1xf32> to vector<64x64xf32>
    %62 = arith.subf %58, %61 : vector<64x64xf32>
    %63 = math.exp %62 : vector<64x64xf32>
    %cst_27 = arith.constant dense<0.000000e+00> : vector<64xf32>
    %64 = vector.multi_reduction <add>, %63, %cst_27 [1] : vector<64x64xf32> to vector<64xf32>
    %65 = vector.shape_cast %64 : vector<64xf32> to vector<64x1xf32>
    %66 = tpu.reciprocal %65 {approx = true} : vector<64x1xf32> -> vector<64x1xf32>
    %67 = vector.broadcast %66 : vector<64x1xf32> to vector<64x64xf32>
    %68 = arith.mulf %63, %67 : vector<64x64xf32>
    %69 = arith.truncf %68 : vector<64x64xf32> to vector<64x64xbf16>
    %70 = vector.extract_strided_slice %15 {offsets = [0, 16], sizes = [64, 16], strides = [1, 1]} : vector<64x32xbf16> to vector<64x16xbf16>
    %cst_28 = arith.constant dense<0.000000e+00> : vector<64x16xf32>
    %71 = tpu.matmul %69, %70, %cst_28 {dimension_numbers = #tpu.dot_dimension_numbers<[1], [0], [0], [1], [0, 0, 1, 1], [], []>} : vector<64x64xbf16>, vector<64x16xbf16>, vector<64x16xf32> -> vector<64x16xf32>
    %72 = vector.extract_strided_slice %14 {offsets = [0, 16], sizes = [64, 16], strides = [1, 1]} : vector<64x32xf32> to vector<64x16xf32>
    %73 = arith.addf %71, %72 : vector<64x16xf32>
    %cst_29 = arith.constant 0.000000e+00 : f32
    %74 = vector.broadcast %cst_29 : f32 to vector<64x16xf32>
    %75 = arith.maximumf %73, %74 : vector<64x16xf32>
    %c0_30 = arith.constant 0 : index
    %c16 = arith.constant 16 : index
    %76 = vector.load %arg13[%c0_30, %c16] : memref<64x32xf32, #tpu.memory_space<vmem>>, vector<64x16xf32>
    tpu.vector_store %arg13[%c0_30, %c16], %75 {strides = array<i32>} : memref<64x32xf32, #tpu.memory_space<vmem>>, vector<64x16xf32>,
    %c0_31 = arith.constant 0 : index
    %c0_32 = arith.constant 0 : index
    %77 = vector.load %arg13[%c0_31, %c0_32] : memref<64x32xf32, #tpu.memory_space<vmem>>, vector<64x32xf32>
    %78 = arith.truncf %77 : vector<64x32xf32> to vector<64x32xbf16>
    %c0_33 = arith.constant 0 : index
    %c0_34 = arith.constant 0 : index
    %79 = vector.load %arg6[%c0_33, %c0_34] : memref<32x32xbf16, #tpu.memory_space<vmem>>, vector<32x32xbf16>
    %cst_35 = arith.constant dense<0.000000e+00> : vector<64x32xf32>
    %80 = tpu.matmul %78, %79, %cst_35 {dimension_numbers = #tpu.dot_dimension_numbers<[1], [0], [0], [1], [0, 0, 1, 1], [], []>} : vector<64x32xbf16>, vector<32x32xbf16>, vector<64x32xf32> -> vector<64x32xf32>
    %c0_36 = arith.constant 0 : index
    %c0_37 = arith.constant 0 : index
    %81 = vector.load %arg7[%c0_36, %c0_37] : memref<32x32xbf16, #tpu.memory_space<vmem>>, vector<32x32xbf16>
    %cst_38 = arith.constant dense<0.000000e+00> : vector<64x32xf32>
    %82 = tpu.matmul %78, %81, %cst_38 {dimension_numbers = #tpu.dot_dimension_numbers<[1], [0], [0], [1], [0, 0, 1, 1], [], []>} : vector<64x32xbf16>, vector<32x32xbf16>, vector<64x32xf32> -> vector<64x32xf32>
    %c0_39 = arith.constant 0 : index
    %c0_40 = arith.constant 0 : index
    %83 = vector.load %arg8[%c0_39, %c0_40] : memref<1x32xf32, #tpu.memory_space<vmem>>, vector<1x32xf32>
    %84 = vector.broadcast %83 : vector<1x32xf32> to vector<64x32xf32>
    %85 = arith.addf %82, %84 : vector<64x32xf32>
    %86 = arith.truncf %80 : vector<64x32xf32> to vector<64x32xbf16>
    %c0_41 = arith.constant 0 : index
    %c0_42 = arith.constant 0 : index
    %87 = vector.load %arg9[%c0_41, %c0_42] : memref<32x4xf32, #tpu.memory_space<vmem>>, vector<32x4xf32>
    %cst_43 = arith.constant dense<0.000000e+00> : vector<64x4xf32>
    %88 = tpu.matmul %77, %87, %cst_43 {dimension_numbers = #tpu.dot_dimension_numbers<[1], [0], [0], [1], [0, 0, 1, 1], [], []>} : vector<64x32xf32>, vector<32x4xf32>, vector<64x4xf32> -> vector<64x4xf32>
    %89 = tpu.transpose %88, [1, 0] : vector<64x4xf32> -> vector<4x64xf32>
    %90 = vector.extract_strided_slice %88 {offsets = [0, 2], sizes = [64, 1], strides = [1, 1]} : vector<64x4xf32> to vector<64x1xf32>
    %91 = vector.extract_strided_slice %89 {offsets = [0, 0], sizes = [1, 64], strides = [1, 1]} : vector<4x64xf32> to vector<1x64xf32>
    %92 = vector.broadcast %90 : vector<64x1xf32> to vector<64x64xf32>
    %93 = vector.broadcast %91 : vector<1x64xf32> to vector<64x64xf32>
    %94 = arith.addf %92, %93 : vector<64x64xf32>
    %cst_44 = arith.constant 0.000000e+00 : f32
    %95 = vector.broadcast %cst_44 : f32 to vector<64x64xf32>
    %96 = arith.cmpf oge, %94, %95 : vector<64x64xf32>
    %cst_45 = arith.constant 2.000000e-01 : f32
    %97 = vector.broadcast %cst_45 : f32 to vector<64x64xf32>
    %98 = arith.mulf %97, %94 : vector<64x64xf32>
    %99 = arith.select %96, %94, %98 : vector<64x64xi1>, vector<64x64xf32>
    %100 = arith.addf %99, %5 : vector<64x64xf32>
    %cst_46 = arith.constant dense<0xFF800000> : vector<64xf32>
    %101 = vector.multi_reduction <maximumf>, %100, %cst_46 [1] : vector<64x64xf32> to vector<64xf32>
    %102 = vector.shape_cast %101 : vector<64xf32> to vector<64x1xf32>
    %103 = vector.broadcast %102 : vector<64x1xf32> to vector<64x64xf32>
    %104 = arith.subf %100, %103 : vector<64x64xf32>
    %105 = math.exp %104 : vector<64x64xf32>
    %cst_47 = arith.constant dense<0.000000e+00> : vector<64xf32>
    %106 = vector.multi_reduction <add>, %105, %cst_47 [1] : vector<64x64xf32> to vector<64xf32>
    %107 = vector.shape_cast %106 : vector<64xf32> to vector<64x1xf32>
    %108 = tpu.reciprocal %107 {approx = true} : vector<64x1xf32> -> vector<64x1xf32>
    %109 = vector.broadcast %108 : vector<64x1xf32> to vector<64x64xf32>
    %110 = arith.mulf %105, %109 : vector<64x64xf32>
    %111 = arith.truncf %110 : vector<64x64xf32> to vector<64x64xbf16>
    %112 = vector.extract_strided_slice %86 {offsets = [0, 0], sizes = [64, 16], strides = [1, 1]} : vector<64x32xbf16> to vector<64x16xbf16>
    %cst_48 = arith.constant dense<0.000000e+00> : vector<64x16xf32>
    %113 = tpu.matmul %111, %112, %cst_48 {dimension_numbers = #tpu.dot_dimension_numbers<[1], [0], [0], [1], [0, 0, 1, 1], [], []>} : vector<64x64xbf16>, vector<64x16xbf16>, vector<64x16xf32> -> vector<64x16xf32>
    %114 = vector.extract_strided_slice %85 {offsets = [0, 0], sizes = [64, 16], strides = [1, 1]} : vector<64x32xf32> to vector<64x16xf32>
    %115 = arith.addf %113, %114 : vector<64x16xf32>
    %cst_49 = arith.constant 0.000000e+00 : f32
    %116 = vector.broadcast %cst_49 : f32 to vector<64x16xf32>
    %117 = arith.maximumf %115, %116 : vector<64x16xf32>
    %c0_50 = arith.constant 0 : index
    %c0_51 = arith.constant 0 : index
    %118 = vector.load %arg13[%c0_50, %c0_51] : memref<64x32xf32, #tpu.memory_space<vmem>>, vector<64x16xf32>
    tpu.vector_store %arg13[%c0_50, %c0_51], %117 {strides = array<i32>} : memref<64x32xf32, #tpu.memory_space<vmem>>, vector<64x16xf32>,
    %119 = vector.extract_strided_slice %88 {offsets = [0, 3], sizes = [64, 1], strides = [1, 1]} : vector<64x4xf32> to vector<64x1xf32>
    %120 = vector.extract_strided_slice %89 {offsets = [1, 0], sizes = [1, 64], strides = [1, 1]} : vector<4x64xf32> to vector<1x64xf32>
    %121 = vector.broadcast %119 : vector<64x1xf32> to vector<64x64xf32>
    %122 = vector.broadcast %120 : vector<1x64xf32> to vector<64x64xf32>
    %123 = arith.addf %121, %122 : vector<64x64xf32>
    %cst_52 = arith.constant 0.000000e+00 : f32
    %124 = vector.broadcast %cst_52 : f32 to vector<64x64xf32>
    %125 = arith.cmpf oge, %123, %124 : vector<64x64xf32>
    %cst_53 = arith.constant 2.000000e-01 : f32
    %126 = vector.broadcast %cst_53 : f32 to vector<64x64xf32>
    %127 = arith.mulf %126, %123 : vector<64x64xf32>
    %128 = arith.select %125, %123, %127 : vector<64x64xi1>, vector<64x64xf32>
    %129 = arith.addf %128, %5 : vector<64x64xf32>
    %cst_54 = arith.constant dense<0xFF800000> : vector<64xf32>
    %130 = vector.multi_reduction <maximumf>, %129, %cst_54 [1] : vector<64x64xf32> to vector<64xf32>
    %131 = vector.shape_cast %130 : vector<64xf32> to vector<64x1xf32>
    %132 = vector.broadcast %131 : vector<64x1xf32> to vector<64x64xf32>
    %133 = arith.subf %129, %132 : vector<64x64xf32>
    %134 = math.exp %133 : vector<64x64xf32>
    %cst_55 = arith.constant dense<0.000000e+00> : vector<64xf32>
    %135 = vector.multi_reduction <add>, %134, %cst_55 [1] : vector<64x64xf32> to vector<64xf32>
    %136 = vector.shape_cast %135 : vector<64xf32> to vector<64x1xf32>
    %137 = tpu.reciprocal %136 {approx = true} : vector<64x1xf32> -> vector<64x1xf32>
    %138 = vector.broadcast %137 : vector<64x1xf32> to vector<64x64xf32>
    %139 = arith.mulf %134, %138 : vector<64x64xf32>
    %140 = arith.truncf %139 : vector<64x64xf32> to vector<64x64xbf16>
    %141 = vector.extract_strided_slice %86 {offsets = [0, 16], sizes = [64, 16], strides = [1, 1]} : vector<64x32xbf16> to vector<64x16xbf16>
    %cst_56 = arith.constant dense<0.000000e+00> : vector<64x16xf32>
    %142 = tpu.matmul %140, %141, %cst_56 {dimension_numbers = #tpu.dot_dimension_numbers<[1], [0], [0], [1], [0, 0, 1, 1], [], []>} : vector<64x64xbf16>, vector<64x16xbf16>, vector<64x16xf32> -> vector<64x16xf32>
    %143 = vector.extract_strided_slice %85 {offsets = [0, 16], sizes = [64, 16], strides = [1, 1]} : vector<64x32xf32> to vector<64x16xf32>
    %144 = arith.addf %142, %143 : vector<64x16xf32>
    %cst_57 = arith.constant 0.000000e+00 : f32
    %145 = vector.broadcast %cst_57 : f32 to vector<64x16xf32>
    %146 = arith.maximumf %144, %145 : vector<64x16xf32>
    %c0_58 = arith.constant 0 : index
    %c16_59 = arith.constant 16 : index
    %147 = vector.load %arg13[%c0_58, %c16_59] : memref<64x32xf32, #tpu.memory_space<vmem>>, vector<64x16xf32>
    tpu.vector_store %arg13[%c0_58, %c16_59], %146 {strides = array<i32>} : memref<64x32xf32, #tpu.memory_space<vmem>>, vector<64x16xf32>,
    %c0_60 = arith.constant 0 : index
    %c0_61 = arith.constant 0 : index
    %148 = vector.load %arg13[%c0_60, %c0_61] : memref<64x32xf32, #tpu.memory_space<vmem>>, vector<64x32xf32>
    %c0_62 = arith.constant 0 : index
    %c0_63 = arith.constant 0 : index
    %149 = vector.load %arg10[%c0_62, %c0_63] : memref<32x8xf32, #tpu.memory_space<vmem>>, vector<32x8xf32>
    %cst_64 = arith.constant dense<0.000000e+00> : vector<64x8xf32>
    %150 = tpu.matmul %148, %149, %cst_64 {dimension_numbers = #tpu.dot_dimension_numbers<[1], [0], [0], [1], [0, 0, 1, 1], [], []>} : vector<64x32xf32>, vector<32x8xf32>, vector<64x8xf32> -> vector<64x8xf32>
    %c0_65 = arith.constant 0 : index
    %c0_66 = arith.constant 0 : index
    %151 = vector.load %arg11[%c0_65, %c0_66] : memref<1x8xf32, #tpu.memory_space<vmem>>, vector<1x8xf32>
    %152 = vector.broadcast %151 : vector<1x8xf32> to vector<64x8xf32>
    %153 = arith.addf %150, %152 : vector<64x8xf32>
    %c0_67 = arith.constant 0 : index
    %c0_68 = arith.constant 0 : index
    %154 = vector.load %arg12[%c0_67, %c0_68] : memref<64x8xf32, #tpu.memory_space<vmem>>, vector<64x8xf32>
    tpu.vector_store %arg12[%c0_67, %c0_68], %153 {strides = array<i32>} : memref<64x8xf32, #tpu.memory_space<vmem>>, vector<64x8xf32>,
    return
  }
}

</mosaic_0001>

<llo_original>
// kernel: gat_forward.1
$region0: #{gat_forward.1}
  #allocation0 [shape = 'u32[]', space=smem, size = 0x4, offset = 0x4, fixed_abs, tag = 'smem constant byte address 0x4 - core index']
  #allocation1 [shape = 'u32[144,128]{1,0:T(1,128)}', space=vmem, size = 0x12000, scoped, tag = 'internal scratch']
  #allocation2 [shape = 'f32[64,32]{1,0:T(8,128)}', space=vmem, size = 0x8000, scoped, tag = 'scratch operand']
  %s0 = inlined_call_operand.vmem [shape: f32[64,32], index: 0, kind: input, shape index: {}]
  %s1 = inlined_call_operand.vmem [shape: f32[64,64], index: 1, kind: input, shape index: {}]
  %s2 = inlined_call_operand.vmem [shape: bf16[32,32], index: 2, kind: input, shape index: {}]
  %s3 = inlined_call_operand.vmem [shape: bf16[32,32], index: 3, kind: input, shape index: {}]
  %s4 = inlined_call_operand.vmem [shape: f32[1,32], index: 4, kind: input, shape index: {}]
  %s5 = inlined_call_operand.vmem [shape: f32[32,4], index: 5, kind: input, shape index: {}]
  %s6 = inlined_call_operand.vmem [shape: bf16[32,32], index: 6, kind: input, shape index: {}]
  %s7 = inlined_call_operand.vmem [shape: bf16[32,32], index: 7, kind: input, shape index: {}]
  %s8 = inlined_call_operand.vmem [shape: f32[1,32], index: 8, kind: input, shape index: {}]
  %s9 = inlined_call_operand.vmem [shape: f32[32,4], index: 9, kind: input, shape index: {}]
  %s10 = inlined_call_operand.vmem [shape: f32[32,8], index: 10, kind: input, shape index: {}]
  %s11 = inlined_call_operand.vmem [shape: f32[1,8], index: 11, kind: input, shape index: {}]
  %s12 = inlined_call_operand.vmem [shape: f32[64,8], index: 12, kind: output, shape index: {}]
  %s13 = sld [smem:[#allocation0]]
  $region58: #{gat_forward.1} parent=0
    _
  %s15 = ssub.s32 1, %s13
  %s16 = scalar_select 0, %s15, %s13
  // Predicated region
  $region2: #{gat_forward.1} parent=0 // pred_check
    _
  $region3: #{gat_forward.1} parent=0 // pred_check_branch
    %18 = sbr.rel (0) target = $region5
  $region4: #{gat_forward.1} parent=0 // pred_region
    _
  $region5: #{gat_forward.1} parent=0 // pred_fallthru
    _
  // Predicated region
  $region6: #{gat_forward.1} parent=0 // pred_check
    _
  $region7: #{gat_forward.1} parent=0 // pred_check_branch
    %20 = sbr.rel (0) target = $region9
  $region8: #{gat_forward.1} parent=0 // pred_region
    _
  $region9: #{gat_forward.1} parent=0 // pred_fallthru
    _
  // Predicated region
  $region10: #{gat_forward.1} parent=0 // pred_check
    _
  $region11: #{gat_forward.1} parent=0 // pred_check_branch
    %22 = sbr.rel (0) target = $region13
  $region12: #{gat_forward.1} parent=0 // pred_region
    _
  $region13: #{gat_forward.1} parent=0 // pred_fallthru
    _
  // Predicated region
  $region14: #{gat_forward.1} parent=0 // pred_check
    _
  $region15: #{gat_forward.1} parent=0 // pred_check_branch
    %24 = sbr.rel (0) target = $region17
  $region16: #{gat_forward.1} parent=0 // pred_region
    _
  $region17: #{gat_forward.1} parent=0 // pred_fallthru
    _
  // Predicated region
  $region18: #{gat_forward.1} parent=0 // pred_check
    _
  $region19: #{gat_forward.1} parent=0 // pred_check_branch
    %26 = sbr.rel (0) target = $region21
  $region20: #{gat_forward.1} parent=0 // pred_region
    _
  $region21: #{gat_forward.1} parent=0 // pred_fallthru
    _
  // Predicated region
  $region22: #{gat_forward.1} parent=0 // pred_check
    _
  $region23: #{gat_forward.1} parent=0 // pred_check_branch
    %28 = sbr.rel (0) target = $region25
  $region24: #{gat_forward.1} parent=0 // pred_region
    _
  $region25: #{gat_forward.1} parent=0 // pred_fallthru
    _
  // Predicated region
  $region26: #{gat_forward.1} parent=0 // pred_check
    _
  $region27: #{gat_forward.1} parent=0 // pred_check_branch
    %30 = sbr.rel (0) target = $region29
  $region28: #{gat_forward.1} parent=0 // pred_region
    _
  $region29: #{gat_forward.1} parent=0 // pred_fallthru
    _
  // Predicated region
  $region30: #{gat_forward.1} parent=0 // pred_check
    _
  $region31: #{gat_forward.1} parent=0 // pred_check_branch
    %32 = sbr.rel (0) target = $region33
  $region32: #{gat_forward.1} parent=0 // pred_region
    _
  $region33: #{gat_forward.1} parent=0 // pred_fallthru
    _
  // Predicated region
  $region34: #{gat_forward.1} parent=0 // pred_check
    _
  $region35: #{gat_forward.1} parent=0 // pred_check_branch
    %34 = sbr.rel (0) target = $region37
  $region36: #{gat_forward.1} parent=0 // pred_region
    _
  $region37: #{gat_forward.1} parent=0 // pred_fallthru
    _
  // Predicated region
  $region38: #{gat_forward.1} parent=0 // pred_check
    _
  $region39: #{gat_forward.1} parent=0 // pred_check_branch
    %36 = sbr.rel (0) target = $region41
  $region40: #{gat_forward.1} parent=0 // pred_region
    _
  $region41: #{gat_forward.1} parent=0 // pred_fallthru
    _
  // Predicated region
  $region42: #{gat_forward.1} parent=0 // pred_check
    _
  $region43: #{gat_forward.1} parent=0 // pred_check_branch
    %38 = sbr.rel (0) target = $region45
  $region44: #{gat_forward.1} parent=0 // pred_region
    _
  $region45: #{gat_forward.1} parent=0 // pred_fallthru
    _
  // Predicated region
  $region46: #{gat_forward.1} parent=0 // pred_check
    _
  $region47: #{gat_forward.1} parent=0 // pred_check_branch
    %40 = sbr.rel (0) target = $region49
  $region48: #{gat_forward.1} parent=0 // pred_region
    _
  $region49: #{gat_forward.1} parent=0 // pred_fallthru
    _
  %v42 = vld [vmem:[%s1] sm:$0xff]
  %v43 = vld [vmem:[%s1 + $0x8] sm:$0xff]
  %v44 = vld [vmem:[%s1 + $0x10] sm:$0xff]
  %v45 = vld [vmem:[%s1 + $0x18] sm:$0xff]
  %v46 = vld [vmem:[%s1 + $0x20] sm:$0xff]
  %v47 = vld [vmem:[%s1 + $0x28] sm:$0xff]
  %v48 = vld [vmem:[%s1 + $0x30] sm:$0xff]
  %v49 = vld [vmem:[%s1 + $0x38] sm:$0xff]
  %vm50 = vcmp.gt.f32.partialorder %v42, 0.0
  %vm51 = vcmp.gt.f32.partialorder %v43, 0.0
  %vm52 = vcmp.gt.f32.partialorder %v44, 0.0
  %vm53 = vcmp.gt.f32.partialorder %v45, 0.0
  %vm54 = vcmp.gt.f32.partialorder %v46, 0.0
  %vm55 = vcmp.gt.f32.partialorder %v47, 0.0
  %vm56 = vcmp.gt.f32.partialorder %v48, 0.0
  %vm57 = vcmp.gt.f32.partialorder %v49, 0.0
  %v58 = vsel %vm50, 0.0, -1e+30
  %v59 = vsel %vm51, 0.0, -1e+30
  %v60 = vsel %vm52, 0.0, -1e+30
  %v61 = vsel %vm53, 0.0, -1e+30
  %v62 = vsel %vm54, 0.0, -1e+30
  %v63 = vsel %vm55, 0.0, -1e+30
  %v64 = vsel %vm56, 0.0, -1e+30
  %v65 = vsel %vm57, 0.0, -1e+30
  %v66 = vld [vmem:[%s0] sm:$0xff]
  %v67 = vld [vmem:[%s0 + $0x8] sm:$0xff]
  %v68 = vld [vmem:[%s0 + $0x10] sm:$0xff]
  %v69 = vld [vmem:[%s0 + $0x18] sm:$0xff]
  %v70 = vld [vmem:[%s0 + $0x20] sm:$0xff]
  %v71 = vld [vmem:[%s0 + $0x28] sm:$0xff]
  %v72 = vld [vmem:[%s0 + $0x30] sm:$0xff]
  %v73 = vld [vmem:[%s0 + $0x38] sm:$0xff]
  %v74 = vpack.c.bf16 %v67, %v66
  %v75 = vpack.c.bf16 %v69, %v68
  %v76 = vpack.c.bf16 %v71, %v70
  %v77 = vpack.c.bf16 %v73, %v72
  %v78 = vld [vmem:[%s2] sm:$0xf]
  %v79 = vld [vmem:[%s2 + $0x4] sm:$0xf]
  %v80 = vld [vmem:[%s2 + $0x8] sm:$0xf]
  %v81 = vld [vmem:[%s2 + $0xc] sm:$0xf]
  %v86 = vunpack.c.l.b16 %v78
  %v87 = vunpack.c.l.b16 %v79
  %v88 = vunpack.c.l.b16 %v80
  %v89 = vunpack.c.l.b16 %v81
  %v90 = vpack.c.b16 %v87, %v86
  %v91 = vpack.c.b16 %v89, %v88
  %vm94 = vcmask 261120
  %v96 = vsel %vm94, %v74, 0
  %v99 = vsel %vm94, %v75, 0
  %v102 = vsel %vm94, %v76, 0
  %v105 = vsel %vm94, %v77, 0
  %107 = vmatprep.subr.bf16.mxu0 0
  %108 = vmatpush1.bf16.msra.mxu0 %v90
  %109 = vmatprep.subr.bf16.mxu0 0
  %110 = vmatpush1.bf16.msra.mxu0 %v91
  %111 = vmatprep.subr.bf16.mxu0 0
  %112 = vmatpush1.bf16.msra.mxu0 0
  %113 = vmatprep.subr.bf16.mxu0 0
  %114 = vmatpush1.bf16.msra.mxu0 0
  %115 = vmatprep.subr.bf16.mxu0 0
  %116 = vmatpush1.bf16.msra.mxu0 0
  %117 = vmatprep.subr.bf16.mxu0 0
  %118 = vmatpush1.bf16.msra.mxu0 0
  %119 = vmatprep.subr.bf16.mxu0 0
  %120 = vmatpush1.bf16.msra.mxu0 0
  %121 = vmatprep.subr.bf16.mxu0 0
  %122 = vmatpush1.bf16.msra.mxu0 0
  %123 = vmatprep.subr.bf16.mxu0 0
  %124 = vmatpush1.bf16.msra.mxu0 0
  %125 = vmatprep.subr.bf16.mxu0 0
  %126 = vmatpush1.bf16.msra.mxu0 0
  %127 = vmatprep.subr.bf16.mxu0 0
  %128 = vmatpush1.bf16.msra.mxu0 0
  %129 = vmatprep.subr.bf16.mxu0 0
  %130 = vmatpush1.bf16.msra.mxu0 0
  %131 = vmatprep.subr.bf16.mxu0 0
  %132 = vmatpush1.bf16.msra.mxu0 0
  %133 = vmatprep.subr.bf16.mxu0 0
  %134 = vmatpush1.bf16.msra.mxu0 0
  %135 = vmatprep.subr.bf16.mxu0 0
  %136 = vmatpush1.bf16.msra.mxu0 0
  %137 = vmatprep.subr.bf16.mxu0 0
  %138 = vmatpush1.bf16.msra.mxu0 0
  %139 = vmatprep.mubr.bf16.mxu0 0
  %140 = vmatmul.mubr.bf16.gmra.mrb[0].mxu0 %v96
  %v141 = vpop.f32.mrb[0].mxu0
  %v142 = vadd.f32 0.0, %v141
  %v143 = vpop.f32.mrb[0].mxu0
  %v144 = vpop.f32.mrb[0].mxu0
  %v145 = vadd.f32 0.0, %v144
  %v146 = vpop.f32.mrb[0].mxu0
  %147 = vmatprep.mubr.bf16.mxu0 0
  %148 = vmatmul.mubr.bf16.gmra.mrb[0].mxu0 %v99
  %v149 = vpop.f32.mrb[0].mxu0
  %v150 = vadd.f32 0.0, %v149
  %v151 = vpop.f32.mrb[0].mxu0
  %v152 = vpop.f32.mrb[0].mxu0
  %v153 = vadd.f32 0.0, %v152
  %v154 = vpop.f32.mrb[0].mxu0
  %155 = vmatprep.mubr.bf16.mxu0 0
  %156 = vmatmul.mubr.bf16.gmra.mrb[0].mxu0 %v102
  %v157 = vpop.f32.mrb[0].mxu0
  %v158 = vadd.f32 0.0, %v157
  %v159 = vpop.f32.mrb[0].mxu0
  %v160 = vpop.f32.mrb[0].mxu0
  %v161 = vadd.f32 0.0, %v160
  %v162 = vpop.f32.mrb[0].mxu0
  %163 = vmatprep.mubr.bf16.mxu0 0
  %164 = vmatmul.mubr.bf16.gmra.mrb[0].mxu0 %v105
  %v165 = vpop.f32.mrb[0].mxu0
  %v166 = vadd.f32 0.0, %v165
  %v167 = vpop.f32.mrb[0].mxu0
  %v168 = vpop.f32.mrb[0].mxu0
  %v169 = vadd.f32 0.0, %v168
  %v170 = vpop.f32.mrb[0].mxu0
  %171 = vdwg.mxu0
  %v172 = vld [vmem:[%s3] sm:$0xf]
  %v173 = vld [vmem:[%s3 + $0x4] sm:$0xf]
  %v174 = vld [vmem:[%s3 + $0x8] sm:$0xf]
  %v175 = vld [vmem:[%s3 + $0xc] sm:$0xf]
  %v176 = vld [vmem:[%s4] sm:$0x1]
  %v178 = vlaneseq
  %v179 = vshrl.u32 %v178, 7
  %v180 = vsub.s32 0, %v179
  %v181 = vrot.slane %v176, %v180
  %v187 = vunpack.c.l.b16 %v172
  %v188 = vunpack.c.l.b16 %v173
  %v189 = vunpack.c.l.b16 %v174
  %v190 = vunpack.c.l.b16 %v175
  %v191 = vpack.c.b16 %v188, %v187
  %v192 = vpack.c.b16 %v190, %v189
  %195 = vmatprep.subr.bf16.mxu0 0
  %196 = vmatpush1.bf16.msra.mxu0 %v191
  %197 = vmatprep.subr.bf16.mxu0 0
  %198 = vmatpush1.bf16.msra.mxu0 %v192
  %199 = vmatprep.subr.bf16.mxu0 0
  %200 = vmatpush1.bf16.msra.mxu0 0
  %201 = vmatprep.subr.bf16.mxu0 0
  %202 = vmatpush1.bf16.msra.mxu0 0
  %203 = vmatprep.subr.bf16.mxu0 0
  %204 = vmatpush1.bf16.msra.mxu0 0
  %205 = vmatprep.subr.bf16.mxu0 0
  %206 = vmatpush1.bf16.msra.mxu0 0
  %207 = vmatprep.subr.bf16.mxu0 0
  %208 = vmatpush1.bf16.msra.mxu0 0
  %209 = vmatprep.subr.bf16.mxu0 0
  %210 = vmatpush1.bf16.msra.mxu0 0
  %211 = vmatprep.subr.bf16.mxu0 0
  %212 = vmatpush1.bf16.msra.mxu0 0
  %213 = vmatprep.subr.bf16.mxu0 0
  %214 = vmatpush1.bf16.msra.mxu0 0
  %215 = vmatprep.subr.bf16.mxu0 0
  %216 = vmatpush1.bf16.msra.mxu0 0
  %217 = vmatprep.subr.bf16.mxu0 0
  %218 = vmatpush1.bf16.msra.mxu0 0
  %219 = vmatprep.subr.bf16.mxu0 0
  %220 = vmatpush1.bf16.msra.mxu0 0
  %221 = vmatprep.subr.bf16.mxu0 0
  %222 = vmatpush1.bf16.msra.mxu0 0
  %223 = vmatprep.subr.bf16.mxu0 0
  %224 = vmatpush1.bf16.msra.mxu0 0
  %225 = vmatprep.subr.bf16.mxu0 0
  %226 = vmatpush1.bf16.msra.mxu0 0
  %227 = vmatprep.mubr.bf16.mxu0 0
  %228 = vmatmul.mubr.bf16.gmra.mrb[0].mxu0 %v96
  %v229 = vpop.f32.mrb[0].mxu0
  %v230 = vadd.f32 %v181, %v229
  %v231 = vpop.f32.mrb[0].mxu0
  %v232 = vpop.f32.mrb[0].mxu0
  %v233 = vadd.f32 %v181, %v232
  %v234 = vpop.f32.mrb[0].mxu0
  %235 = vmatprep.mubr.bf16.mxu0 0
  %236 = vmatmul.mubr.bf16.gmra.mrb[0].mxu0 %v99
  %v237 = vpop.f32.mrb[0].mxu0
  %v238 = vadd.f32 %v181, %v237
  %v239 = vpop.f32.mrb[0].mxu0
  %v240 = vpop.f32.mrb[0].mxu0
  %v241 = vadd.f32 %v181, %v240
  %v242 = vpop.f32.mrb[0].mxu0
  %243 = vmatprep.mubr.bf16.mxu0 0
  %244 = vmatmul.mubr.bf16.gmra.mrb[0].mxu0 %v102
  %v245 = vpop.f32.mrb[0].mxu0
  %v246 = vadd.f32 %v181, %v245
  %v247 = vpop.f32.mrb[0].mxu0
  %v248 = vpop.f32.mrb[0].mxu0
  %v249 = vadd.f32 %v181, %v248
  %v250 = vpop.f32.mrb[0].mxu0
  %251 = vmatprep.mubr.bf16.mxu0 0
  %252 = vmatmul.mubr.bf16.gmra.mrb[0].mxu0 %v105
  %v253 = vpop.f32.mrb[0].mxu0
  %v254 = vadd.f32 %v181, %v253
  %v255 = vpop.f32.mrb[0].mxu0
  %v256 = vpop.f32.mrb[0].mxu0
  %v257 = vadd.f32 %v181, %v256
  %v258 = vpop.f32.mrb[0].mxu0
  %259 = vdwg.mxu0
  %v260 = vpack.c.bf16 %v145, %v142
  %v261 = vpack.c.bf16 %v153, %v150
  %v262 = vpack.c.bf16 %v161, %v158
  %v263 = vpack.c.bf16 %v169, %v166
  %v264 = vld [vmem:[%s5] sm:$0xff]
  %v265 = vld [vmem:[%s5 + $0x8] sm:$0xff]
  %v266 = vld [vmem:[%s5 + $0x10] sm:$0xff]
  %v267 = vld [vmem:[%s5 + $0x18] sm:$0xff]
  %v269 = vsel %vm94, %v66, 0
  %v272 = vsel %vm94, %v67, 0
  %v275 = vsel %vm94, %v68, 0
  %v278 = vsel %vm94, %v69, 0
  %v281 = vsel %vm94, %v70, 0
  %v284 = vsel %vm94, %v71, 0
  %v287 = vsel %vm94, %v72, 0
  %v290 = vsel %vm94, %v73, 0
  %292 = vmatprep.subr.mxu0 0.0
  %293 = vmatpush1.msra.mxu0 %v264
  %294 = vmatprep.subr.mxu0 0.0
  %295 = vmatpush1.msra.mxu0 %v265
  %296 = vmatprep.subr.mxu0 0.0
  %297 = vmatpush1.msra.mxu0 %v266
  %298 = vmatprep.subr.mxu0 0.0
  %299 = vmatpush1.msra.mxu0 %v267
  %300 = vmatprep.subr.mxu0 0.0
  %301 = vmatpush1.msra.mxu0 0.0
  %302 = vmatprep.subr.mxu0 0.0
  %303 = vmatpush1.msra.mxu0 0.0
  %304 = vmatprep.subr.mxu0 0.0
  %305 = vmatpush1.msra.mxu0 0.0
  %306 = vmatprep.subr.mxu0 0.0
  %307 = vmatpush1.msra.mxu0 0.0
  %308 = vmatprep.subr.mxu0 0.0
  %309 = vmatpush1.msra.mxu0 0.0
  %310 = vmatprep.subr.mxu0 0.0
  %311 = vmatpush1.msra.mxu0 0.0
  %312 = vmatprep.subr.mxu0 0.0
  %313 = vmatpush1.msra.mxu0 0.0
  %314 = vmatprep.subr.mxu0 0.0
  %315 = vmatpush1.msra.mxu0 0.0
  %316 = vmatprep.subr.mxu0 0.0
  %317 = vmatpush1.msra.mxu0 0.0
  %318 = vmatprep.subr.mxu0 0.0
  %319 = vmatpush1.msra.mxu0 0.0
  %320 = vmatprep.subr.mxu0 0.0
  %321 = vmatpush1.msra.mxu0 0.0
  %322 = vmatprep.subr.mxu0 0.0
  %323 = vmatpush1.msra.mxu0 0.0
  %324 = vmatprep.subr.mxu0 0.0
  %325 = vmatpush1.msra.mxu0 0.0
  %326 = vmatprep.subr.mxu0 0.0
  %327 = vmatpush1.msra.mxu0 0.0
  %328 = vmatprep.subr.mxu0 0.0
  %329 = vmatpush1.msra.mxu0 0.0
  %330 = vmatprep.subr.mxu0 0.0
  %331 = vmatpush1.msra.mxu0 0.0
  %332 = vmatprep.subr.mxu0 0.0
  %333 = vmatpush1.msra.mxu0 0.0
  %334 = vmatprep.subr.mxu0 0.0
  %335 = vmatpush1.msra.mxu0 0.0
  %336 = vmatprep.subr.mxu0 0.0
  %337 = vmatpush1.msra.mxu0 0.0
  %338 = vmatprep.subr.mxu0 0.0
  %339 = vmatpush1.msra.mxu0 0.0
  %340 = vmatprep.subr.mxu0 0.0
  %341 = vmatpush1.msra.mxu0 0.0
  %342 = vmatprep.subr.mxu0 0.0
  %343 = vmatpush1.msra.mxu0 0.0
  %344 = vmatprep.subr.mxu0 0.0
  %345 = vmatpush1.msra.mxu0 0.0
  %346 = vmatprep.subr.mxu0 0.0
  %347 = vmatpush1.msra.mxu0 0.0
  %348 = vmatprep.subr.mxu0 0.0
  %349 = vmatpush1.msra.mxu0 0.0
  %350 = vmatprep.subr.mxu0 0.0
  %351 = vmatpush1.msra.mxu0 0.0
  %352 = vmatprep.subr.mxu0 0.0
  %353 = vmatpush1.msra.mxu0 0.0
  %354 = vmatprep.subr.mxu0 0.0
  %355 = vmatpush1.msra.mxu0 0.0
  %356 = vmatprep.mubr.f32.mxu0 0.0
  %357 = vmatmul.mubr.f32.gmra.mrb[0].mxu0 %v269
  %v358 = vpop.f32.mrb[0].mxu0
  %v359 = vadd.f32 0.0, %v358
  %v360 = vpop.f32.mrb[0].mxu0
  %361 = vmatprep.mubr.f32.mxu0 0.0
  %362 = vmatmul.mubr.f32.gmra.mrb[0].mxu0 %v272
  %v363 = vpop.f32.mrb[0].mxu0
  %v364 = vadd.f32 0.0, %v363
  %v365 = vpop.f32.mrb[0].mxu0
  %366 = vmatprep.mubr.f32.mxu0 0.0
  %367 = vmatmul.mubr.f32.gmra.mrb[0].mxu0 %v275
  %v368 = vpop.f32.mrb[0].mxu0
  %v369 = vadd.f32 0.0, %v368
  %v370 = vpop.f32.mrb[0].mxu0
  %371 = vmatprep.mubr.f32.mxu0 0.0
  %372 = vmatmul.mubr.f32.gmra.mrb[0].mxu0 %v278
  %v373 = vpop.f32.mrb[0].mxu0
  %v374 = vadd.f32 0.0, %v373
  %v375 = vpop.f32.mrb[0].mxu0
  %376 = vmatprep.mubr.f32.mxu0 0.0
  %377 = vmatmul.mubr.f32.gmra.mrb[0].mxu0 %v281
  %v378 = vpop.f32.mrb[0].mxu0
  %v379 = vadd.f32 0.0, %v378
  %v380 = vpop.f32.mrb[0].mxu0
  %381 = vmatprep.mubr.f32.mxu0 0.0
  %382 = vmatmul.mubr.f32.gmra.mrb[0].mxu0 %v284
  %v383 = vpop.f32.mrb[0].mxu0
  %v384 = vadd.f32 0.0, %v383
  %v385 = vpop.f32.mrb[0].mxu0
  %386 = vmatprep.mubr.f32.mxu0 0.0
  %387 = vmatmul.mubr.f32.gmra.mrb[0].mxu0 %v287
  %v388 = vpop.f32.mrb[0].mxu0
  %v389 = vadd.f32 0.0, %v388
  %v390 = vpop.f32.mrb[0].mxu0
  %391 = vmatprep.mubr.f32.mxu0 0.0
  %392 = vmatmul.mubr.f32.gmra.mrb[0].mxu0 %v290
  %v393 = vpop.f32.mrb[0].mxu0
  %v394 = vadd.f32 0.0, %v393
  %v395 = vpop.f32.mrb[0].mxu0
  %396 = vdwg.mxu0
  %397 = vxpose.xlu0.b32.start [1/16] %v359, 128
  %398 = vxpose.xlu0.b32.cont [2/16] %v364, 128
  %399 = vxpose.xlu0.b32.cont [3/16] %v369, 128
  %400 = vxpose.xlu0.b32.cont [4/16] %v374, 128
  %401 = vxpose.xlu0.b32.cont [5/16] %v379, 128
  %402 = vxpose.xlu0.b32.cont [6/16] %v384, 128
  %403 = vxpose.xlu0.b32.cont [7/16] %v389, 128
  %404 = vxpose.xlu0.b32.cont [8/16] %v394, 128
  %405 = vxpose.xlu0.b32.cont [9/16] 0.0, 128
  %406 = vxpose.xlu0.b32.cont [10/16] 0.0, 128
  %407 = vxpose.xlu0.b32.cont [11/16] 0.0, 128
  %408 = vxpose.xlu0.b32.cont [12/16] 0.0, 128
  %409 = vxpose.xlu0.b32.cont [13/16] 0.0, 128
  %410 = vxpose.xlu0.b32.cont [14/16] 0.0, 128
  %411 = vxpose.xlu0.b32.cont [15/16] 0.0, 128
  %412 = vxpose.xlu0.b32.end [16/16] 0.0, 128
  %v413 = vpop.trf.xlu0
  %v414 = vpop.trf.xlu0
  %v415 = vpop.trf.xlu0
  %v416 = vpop.trf.xlu0
  %v417 = vpop.trf.xlu0
  %v418 = vpop.trf.xlu0
  %v419 = vpop.trf.xlu0
  %v420 = vpop.trf.xlu0
  %v421 = vpop.trf.xlu0
  %v422 = vpop.trf.xlu0
  %v423 = vpop.trf.xlu0
  %v424 = vpop.trf.xlu0
  %v425 = vpop.trf.xlu0
  %v426 = vpop.trf.xlu0
  %v427 = vpop.trf.xlu0
  %v428 = vpop.trf.xlu0
  %430 = vset.pattern.permute.xlu0 2
  %431 = vperm.xlu0 %430, %v359
  %v432 = vpop.permute.xlu0 %431
  %435 = vset.pattern.permute.xlu0 2
  %436 = vperm.xlu0 %435, %v364
  %v437 = vpop.permute.xlu0 %436
  %440 = vset.pattern.permute.xlu0 2
  %441 = vperm.xlu0 %440, %v369
  %v442 = vpop.permute.xlu0 %441
  %445 = vset.pattern.permute.xlu0 2
  %446 = vperm.xlu0 %445, %v374
  %v447 = vpop.permute.xlu0 %446
  %450 = vset.pattern.permute.xlu0 2
  %451 = vperm.xlu0 %450, %v379
  %v452 = vpop.permute.xlu0 %451
  %455 = vset.pattern.permute.xlu0 2
  %456 = vperm.xlu0 %455, %v384
  %v457 = vpop.permute.xlu0 %456
  %460 = vset.pattern.permute.xlu0 2
  %461 = vperm.xlu0 %460, %v389
  %v462 = vpop.permute.xlu0 %461
  %465 = vset.pattern.permute.xlu0 2
  %466 = vperm.xlu0 %465, %v394
  %v467 = vpop.permute.xlu0 %466
  %v469 = vlaneseq
  %v470 = vshrl.u32 %v469, 7
  %v471 = vsub.s32 0, %v470
  %v472 = vrot.slane %v413, %v471
  %v473 = vadd.f32 %v432, %v472
  %v474 = vadd.f32 %v437, %v472
  %v475 = vadd.f32 %v442, %v472
  %v476 = vadd.f32 %v447, %v472
  %v477 = vadd.f32 %v452, %v472
  %v478 = vadd.f32 %v457, %v472
  %v479 = vadd.f32 %v462, %v472
  %v480 = vadd.f32 %v467, %v472
  %vm481 = vcmp.ge.f32.partialorder %v473, 0.0
  %vm482 = vcmp.ge.f32.partialorder %v474, 0.0
  %vm483 = vcmp.ge.f32.partialorder %v475, 0.0
  %vm484 = vcmp.ge.f32.partialorder %v476, 0.0
  %vm485 = vcmp.ge.f32.partialorder %v477, 0.0
  %vm486 = vcmp.ge.f32.partialorder %v478, 0.0
  %vm487 = vcmp.ge.f32.partialorder %v479, 0.0
  %vm488 = vcmp.ge.f32.partialorder %v480, 0.0
  %v489 = vmul.f32 %v473, 0.2
  %v490 = vmul.f32 %v474, 0.2
  %v491 = vmul.f32 %v475, 0.2
  %v492 = vmul.f32 %v476, 0.2
  %v493 = vmul.f32 %v477, 0.2
  %v494 = vmul.f32 %v478, 0.2
  %v495 = vmul.f32 %v479, 0.2
  %v496 = vmul.f32 %v480, 0.2
  %v497 = vsel %vm481, %v473, %v489
  %v498 = vsel %vm482, %v474, %v490
  %v499 = vsel %vm483, %v475, %v491
  %v500 = vsel %vm484, %v476, %v492
  %v501 = vsel %vm485, %v477, %v493
  %v502 = vsel %vm486, %v478, %v494
  %v503 = vsel %vm487, %v479, %v495
  %v504 = vsel %vm488, %v480, %v496
  %v505 = vadd.f32 %v497, %v58
  %v506 = vadd.f32 %v498, %v59
  %v507 = vadd.f32 %v499, %v60
  %v508 = vadd.f32 %v500, %v61
  %v509 = vadd.f32 %v501, %v62
  %v510 = vadd.f32 %v502, %v63
  %v511 = vadd.f32 %v503, %v64
  %v512 = vadd.f32 %v504, %v65
  %vm513 = vcmask 523264
  %v514 = vsel %vm513, %v505, -inf
  %515 = vmax.xlane.f32.xlu0 %v514
  %v516 = vpop.xlane.xlu0 %515
  %v517 = vsel %vm513, %v506, -inf
  %518 = vmax.xlane.f32.xlu0 %v517
  %v519 = vpop.xlane.xlu0 %518
  %v520 = vsel %vm513, %v507, -inf
  %521 = vmax.xlane.f32.xlu0 %v520
  %v522 = vpop.xlane.xlu0 %521
  %v523 = vsel %vm513, %v508, -inf
  %524 = vmax.xlane.f32.xlu0 %v523
  %v525 = vpop.xlane.xlu0 %524
  %v526 = vsel %vm513, %v509, -inf
  %527 = vmax.xlane.f32.xlu0 %v526
  %v528 = vpop.xlane.xlu0 %527
  %v529 = vsel %vm513, %v510, -inf
  %530 = vmax.xlane.f32.xlu0 %v529
  %v531 = vpop.xlane.xlu0 %530
  %v532 = vsel %vm513, %v511, -inf
  %533 = vmax.xlane.f32.xlu0 %v532
  %v534 = vpop.xlane.xlu0 %533
  %v535 = vsel %vm513, %v512, -inf
  %536 = vmax.xlane.f32.xlu0 %v535
  %v537 = vpop.xlane.xlu0 %536
  %v538 = vsub.f32 %v505, %v516
  %v539 = vsub.f32 %v506, %v519
  %v540 = vsub.f32 %v507, %v522
  %v541 = vsub.f32 %v508, %v525
  %v542 = vsub.f32 %v509, %v528
  %v543 = vsub.f32 %v510, %v531
  %v544 = vsub.f32 %v511, %v534
  %v545 = vsub.f32 %v512, %v537
  %v546 = vmul.f32 %v538, 1.442695
  %v547 = vpow.pop %v546
  %v548 = vmul.f32 %v539, 1.442695
  %v549 = vpow.pop %v548
  %v550 = vmul.f32 %v540, 1.442695
  %v551 = vpow.pop %v550
  %v552 = vmul.f32 %v541, 1.442695
  %v553 = vpow.pop %v552
  %v554 = vmul.f32 %v542, 1.442695
  %v555 = vpow.pop %v554
  %v556 = vmul.f32 %v543, 1.442695
  %v557 = vpow.pop %v556
  %v558 = vmul.f32 %v544, 1.442695
  %v559 = vpow.pop %v558
  %v560 = vmul.f32 %v545, 1.442695
  %v561 = vpow.pop %v560
  %v562 = vsel %vm513, %v547, 0.0
  %563 = vadd.xlane.f32.xlu0 %v562
  %v564 = vpop.xlane.xlu0 %563
  %v565 = vsel %vm513, %v549, 0.0
  %566 = vadd.xlane.f32.xlu0 %v565
  %v567 = vpop.xlane.xlu0 %566
  %v568 = vsel %vm513, %v551, 0.0
  %569 = vadd.xlane.f32.xlu0 %v568
  %v570 = vpop.xlane.xlu0 %569
  %v571 = vsel %vm513, %v553, 0.0
  %572 = vadd.xlane.f32.xlu0 %v571
  %v573 = vpop.xlane.xlu0 %572
  %v574 = vsel %vm513, %v555, 0.0
  %575 = vadd.xlane.f32.xlu0 %v574
  %v576 = vpop.xlane.xlu0 %575
  %v577 = vsel %vm513, %v557, 0.0
  %578 = vadd.xlane.f32.xlu0 %v577
  %v579 = vpop.xlane.xlu0 %578
  %v580 = vsel %vm513, %v559, 0.0
  %581 = vadd.xlane.f32.xlu0 %v580
  %v582 = vpop.xlane.xlu0 %581
  %v583 = vsel %vm513, %v561, 0.0
  %584 = vadd.xlane.f32.xlu0 %v583
  %v585 = vpop.xlane.xlu0 %584
  %v586 = vrcp.pop %v564
  %v587 = vrcp.pop %v567
  %v588 = vrcp.pop %v570
  %v589 = vrcp.pop %v573
  %v590 = vrcp.pop %v576
  %v591 = vrcp.pop %v579
  %v592 = vrcp.pop %v582
  %v593 = vrcp.pop %v585
  %v594 = vmul.f32 %v547, %v586
  %v595 = vmul.f32 %v549, %v587
  %v596 = vmul.f32 %v551, %v588
  %v597 = vmul.f32 %v553, %v589
  %v598 = vmul.f32 %v555, %v590
  %v599 = vmul.f32 %v557, %v591
  %v600 = vmul.f32 %v559, %v592
  %v601 = vmul.f32 %v561, %v593
  %v602 = vpack.c.bf16 %v595, %v594
  %v603 = vpack.c.bf16 %v597, %v596
  %v604 = vpack.c.bf16 %v599, %v598
  %v605 = vpack.c.bf16 %v601, %v600
  %v607 = vsel %vm513, %v602, 0
  %v610 = vsel %vm513, %v603, 0
  %v613 = vsel %vm513, %v604, 0
  %v616 = vsel %vm513, %v605, 0
  %618 = vmatprep.subr.bf16.mxu0 0
  %619 = vmatpush1.bf16.msra.mxu0 %v260
  %620 = vmatprep.subr.bf16.mxu0 0
  %621 = vmatpush1.bf16.msra.mxu0 %v261
  %622 = vmatprep.subr.bf16.mxu0 0
  %623 = vmatpush1.bf16.msra.mxu0 %v262
  %624 = vmatprep.subr.bf16.mxu0 0
  %625 = vmatpush1.bf16.msra.mxu0 %v263
  %626 = vmatprep.subr.bf16.mxu0 0
  %627 = vmatpush1.bf16.msra.mxu0 0
  %628 = vmatprep.subr.bf16.mxu0 0
  %629 = vmatpush1.bf16.msra.mxu0 0
  %630 = vmatprep.subr.bf16.mxu0 0
  %631 = vmatpush1.bf16.msra.mxu0 0
  %632 = vmatprep.subr.bf16.mxu0 0
  %633 = vmatpush1.bf16.msra.mxu0 0
  %634 = vmatprep.subr.bf16.mxu0 0
  %635 = vmatpush1.bf16.msra.mxu0 0
  %636 = vmatprep.subr.bf16.mxu0 0
  %637 = vmatpush1.bf16.msra.mxu0 0
  %638 = vmatprep.subr.bf16.mxu0 0
  %639 = vmatpush1.bf16.msra.mxu0 0
  %640 = vmatprep.subr.bf16.mxu0 0
  %641 = vmatpush1.bf16.msra.mxu0 0
  %642 = vmatprep.subr.bf16.mxu0 0
  %643 = vmatpush1.bf16.msra.mxu0 0
  %644 = vmatprep.subr.bf16.mxu0 0
  %645 = vmatpush1.bf16.msra.mxu0 0
  %646 = vmatprep.subr.bf16.mxu0 0
  %647 = vmatpush1.bf16.msra.mxu0 0
  %648 = vmatprep.subr.bf16.mxu0 0
  %649 = vmatpush1.bf16.msra.mxu0 0
  %650 = vmatprep.mubr.bf16.mxu0 0
  %651 = vmatmul.mubr.bf16.gmra.mrb[0].mxu0 %v607
  %v652 = vpop.f32.mrb[0].mxu0
  %v653 = vadd.f32 %v230, %v652
  %v654 = vpop.f32.mrb[0].mxu0
  %v655 = vpop.f32.mrb[0].mxu0
  %v656 = vadd.f32 %v233, %v655
  %v657 = vpop.f32.mrb[0].mxu0
  %658 = vmatprep.mubr.bf16.mxu0 0
  %659 = vmatmul.mubr.bf16.gmra.mrb[0].mxu0 %v610
  %v660 = vpop.f32.mrb[0].mxu0
  %v661 = vadd.f32 %v238, %v660
  %v662 = vpop.f32.mrb[0].mxu0
  %v663 = vpop.f32.mrb[0].mxu0
  %v664 = vadd.f32 %v241, %v663
  %v665 = vpop.f32.mrb[0].mxu0
  %666 = vmatprep.mubr.bf16.mxu0 0
  %667 = vmatmul.mubr.bf16.gmra.mrb[0].mxu0 %v613
  %v668 = vpop.f32.mrb[0].mxu0
  %v669 = vadd.f32 %v246, %v668
  %v670 = vpop.f32.mrb[0].mxu0
  %v671 = vpop.f32.mrb[0].mxu0
  %v672 = vadd.f32 %v249, %v671
  %v673 = vpop.f32.mrb[0].mxu0
  %674 = vmatprep.mubr.bf16.mxu0 0
  %675 = vmatmul.mubr.bf16.gmra.mrb[0].mxu0 %v616
  %v676 = vpop.f32.mrb[0].mxu0
  %v677 = vadd.f32 %v254, %v676
  %v678 = vpop.f32.mrb[0].mxu0
  %v679 = vpop.f32.mrb[0].mxu0
  %v680 = vadd.f32 %v257, %v679
  %v681 = vpop.f32.mrb[0].mxu0
  %682 = vdwg.mxu0
  %v683 = vmax.f32 %v653, 0.0
  %v684 = vmax.f32 %v656, 0.0
  %v685 = vmax.f32 %v661, 0.0
  %v686 = vmax.f32 %v664, 0.0
  %v687 = vmax.f32 %v669, 0.0
  %v688 = vmax.f32 %v672, 0.0
  %v689 = vmax.f32 %v677, 0.0
  %v690 = vmax.f32 %v680, 0.0
  %vm691 = vcmask 130048
  %692 = vst.msk [vmem:[#allocation2] sm:$0xff] %vm691, %v683
  %693 = vst.msk [vmem:[#allocation2 + $0x8] sm:$0xff] %vm691, %v684
  %694 = vst.msk [vmem:[#allocation2 + $0x10] sm:$0xff] %vm691, %v685
  %695 = vst.msk [vmem:[#allocation2 + $0x18] sm:$0xff] %vm691, %v686
  %696 = vst.msk [vmem:[#allocation2 + $0x20] sm:$0xff] %vm691, %v687
  %697 = vst.msk [vmem:[#allocation2 + $0x28] sm:$0xff] %vm691, %v688
  %698 = vst.msk [vmem:[#allocation2 + $0x30] sm:$0xff] %vm691, %v689
  %699 = vst.msk [vmem:[#allocation2 + $0x38] sm:$0xff] %vm691, %v690
  %700 = vset.pattern.permute.xlu0 3
  %701 = vperm.xlu0 %700, %v359
  %v702 = vpop.permute.xlu0 %701
  %704 = vset.pattern.permute.xlu0 3
  %705 = vperm.xlu0 %704, %v364
  %v706 = vpop.permute.xlu0 %705
  %708 = vset.pattern.permute.xlu0 3
  %709 = vperm.xlu0 %708, %v369
  %v710 = vpop.permute.xlu0 %709
  %712 = vset.pattern.permute.xlu0 3
  %713 = vperm.xlu0 %712, %v374
  %v714 = vpop.permute.xlu0 %713
  %716 = vset.pattern.permute.xlu0 3
  %717 = vperm.xlu0 %716, %v379
  %v718 = vpop.permute.xlu0 %717
  %720 = vset.pattern.permute.xlu0 3
  %721 = vperm.xlu0 %720, %v384
  %v722 = vpop.permute.xlu0 %721
  %724 = vset.pattern.permute.xlu0 3
  %725 = vperm.xlu0 %724, %v389
  %v726 = vpop.permute.xlu0 %725
  %728 = vset.pattern.permute.xlu0 3
  %729 = vperm.xlu0 %728, %v394
  %v730 = vpop.permute.xlu0 %729
  %v732 = vlaneseq
  %v733 = vshrl.u32 %v732, 7
  %v734 = vsub.s32 1, %v733
  %v735 = vrot.slane %v413, %v734
  %v736 = vadd.f32 %v702, %v735
  %v737 = vadd.f32 %v706, %v735
  %v738 = vadd.f32 %v710, %v735
  %v739 = vadd.f32 %v714, %v735
  %v740 = vadd.f32 %v718, %v735
  %v741 = vadd.f32 %v722, %v735
  %v742 = vadd.f32 %v726, %v735
  %v743 = vadd.f32 %v730, %v735
  %vm744 = vcmp.ge.f32.partialorder %v736, 0.0
  %vm745 = vcmp.ge.f32.partialorder %v737, 0.0
  %vm746 = vcmp.ge.f32.partialorder %v738, 0.0
  %vm747 = vcmp.ge.f32.partialorder %v739, 0.0
  %vm748 = vcmp.ge.f32.partialorder %v740, 0.0
  %vm749 = vcmp.ge.f32.partialorder %v741, 0.0
  %vm750 = vcmp.ge.f32.partialorder %v742, 0.0
  %vm751 = vcmp.ge.f32.partialorder %v743, 0.0
  %v752 = vmul.f32 %v736, 0.2
  %v753 = vmul.f32 %v737, 0.2
  %v754 = vmul.f32 %v738, 0.2
  %v755 = vmul.f32 %v739, 0.2
  %v756 = vmul.f32 %v740, 0.2
  %v757 = vmul.f32 %v741, 0.2
  %v758 = vmul.f32 %v742, 0.2
  %v759 = vmul.f32 %v743, 0.2
  %v760 = vsel %vm744, %v736, %v752
  %v761 = vsel %vm745, %v737, %v753
  %v762 = vsel %vm746, %v738, %v754
  %v763 = vsel %vm747, %v739, %v755
  %v764 = vsel %vm748, %v740, %v756
  %v765 = vsel %vm749, %v741, %v757
  %v766 = vsel %vm750, %v742, %v758
  %v767 = vsel %vm751, %v743, %v759
  %v768 = vadd.f32 %v760, %v58
  %v769 = vadd.f32 %v761, %v59
  %v770 = vadd.f32 %v762, %v60
  %v771 = vadd.f32 %v763, %v61
  %v772 = vadd.f32 %v764, %v62
  %v773 = vadd.f32 %v765, %v63
  %v774 = vadd.f32 %v766, %v64
  %v775 = vadd.f32 %v767, %v65
  %v776 = vsel %vm513, %v768, -inf
  %777 = vmax.xlane.f32.xlu0 %v776
  %v778 = vpop.xlane.xlu0 %777
  %v779 = vsel %vm513, %v769, -inf
  %780 = vmax.xlane.f32.xlu0 %v779
  %v781 = vpop.xlane.xlu0 %780
  %v782 = vsel %vm513, %v770, -inf
  %783 = vmax.xlane.f32.xlu0 %v782
  %v784 = vpop.xlane.xlu0 %783
  %v785 = vsel %vm513, %v771, -inf
  %786 = vmax.xlane.f32.xlu0 %v785
  %v787 = vpop.xlane.xlu0 %786
  %v788 = vsel %vm513, %v772, -inf
  %789 = vmax.xlane.f32.xlu0 %v788
  %v790 = vpop.xlane.xlu0 %789
  %v791 = vsel %vm513, %v773, -inf
  %792 = vmax.xlane.f32.xlu0 %v791
  %v793 = vpop.xlane.xlu0 %792
  %v794 = vsel %vm513, %v774, -inf
  %795 = vmax.xlane.f32.xlu0 %v794
  %v796 = vpop.xlane.xlu0 %795
  %v797 = vsel %vm513, %v775, -inf
  %798 = vmax.xlane.f32.xlu0 %v797
  %v799 = vpop.xlane.xlu0 %798
  %v800 = vsub.f32 %v768, %v778
  %v801 = vsub.f32 %v769, %v781
  %v802 = vsub.f32 %v770, %v784
  %v803 = vsub.f32 %v771, %v787
  %v804 = vsub.f32 %v772, %v790
  %v805 = vsub.f32 %v773, %v793
  %v806 = vsub.f32 %v774, %v796
  %v807 = vsub.f32 %v775, %v799
  %v808 = vmul.f32 %v800, 1.442695
  %v809 = vpow.pop %v808
  %v810 = vmul.f32 %v801, 1.442695
  %v811 = vpow.pop %v810
  %v812 = vmul.f32 %v802, 1.442695
  %v813 = vpow.pop %v812
  %v814 = vmul.f32 %v803, 1.442695
  %v815 = vpow.pop %v814
  %v816 = vmul.f32 %v804, 1.442695
  %v817 = vpow.pop %v816
  %v818 = vmul.f32 %v805, 1.442695
  %v819 = vpow.pop %v818
  %v820 = vmul.f32 %v806, 1.442695
  %v821 = vpow.pop %v820
  %v822 = vmul.f32 %v807, 1.442695
  %v823 = vpow.pop %v822
  %v824 = vsel %vm513, %v809, 0.0
  %825 = vadd.xlane.f32.xlu0 %v824
  %v826 = vpop.xlane.xlu0 %825
  %v827 = vsel %vm513, %v811, 0.0
  %828 = vadd.xlane.f32.xlu0 %v827
  %v829 = vpop.xlane.xlu0 %828
  %v830 = vsel %vm513, %v813, 0.0
  %831 = vadd.xlane.f32.xlu0 %v830
  %v832 = vpop.xlane.xlu0 %831
  %v833 = vsel %vm513, %v815, 0.0
  %834 = vadd.xlane.f32.xlu0 %v833
  %v835 = vpop.xlane.xlu0 %834
  %v836 = vsel %vm513, %v817, 0.0
  %837 = vadd.xlane.f32.xlu0 %v836
  %v838 = vpop.xlane.xlu0 %837
  %v839 = vsel %vm513, %v819, 0.0
  %840 = vadd.xlane.f32.xlu0 %v839
  %v841 = vpop.xlane.xlu0 %840
  %v842 = vsel %vm513, %v821, 0.0
  %843 = vadd.xlane.f32.xlu0 %v842
  %v844 = vpop.xlane.xlu0 %843
  %v845 = vsel %vm513, %v823, 0.0
  %846 = vadd.xlane.f32.xlu0 %v845
  %v847 = vpop.xlane.xlu0 %846
  %v848 = vrcp.pop %v826
  %v849 = vrcp.pop %v829
  %v850 = vrcp.pop %v832
  %v851 = vrcp.pop %v835
  %v852 = vrcp.pop %v838
  %v853 = vrcp.pop %v841
  %v854 = vrcp.pop %v844
  %v855 = vrcp.pop %v847
  %v856 = vmul.f32 %v809, %v848
  %v857 = vmul.f32 %v811, %v849
  %v858 = vmul.f32 %v813, %v850
  %v859 = vmul.f32 %v815, %v851
  %v860 = vmul.f32 %v817, %v852
  %v861 = vmul.f32 %v819, %v853
  %v862 = vmul.f32 %v821, %v854
  %v863 = vmul.f32 %v823, %v855
  %v864 = vpack.c.bf16 %v857, %v856
  %v865 = vpack.c.bf16 %v859, %v858
  %v866 = vpack.c.bf16 %v861, %v860
  %v867 = vpack.c.bf16 %v863, %v862
  %872 = vrot.lane.b32.xlu0 %v260, 112
  %v873 = vpop.permute.xlu0 %872
  %874 = vrot.lane.b32.xlu0 %v261, 112
  %v875 = vpop.permute.xlu0 %874
  %876 = vrot.lane.b32.xlu0 %v262, 112
  %v877 = vpop.permute.xlu0 %876
  %878 = vrot.lane.b32.xlu0 %v263, 112
  %v879 = vpop.permute.xlu0 %878
  %892 = vrot.lane.b32.xlu0 %v230, 112
  %v893 = vpop.permute.xlu0 %892
  %894 = vrot.lane.b32.xlu0 %v233, 112
  %v895 = vpop.permute.xlu0 %894
  %896 = vrot.lane.b32.xlu0 %v238, 112
  %v897 = vpop.permute.xlu0 %896
  %898 = vrot.lane.b32.xlu0 %v241, 112
  %v899 = vpop.permute.xlu0 %898
  %900 = vrot.lane.b32.xlu0 %v246, 112
  %v901 = vpop.permute.xlu0 %900
  %902 = vrot.lane.b32.xlu0 %v249, 112
  %v903 = vpop.permute.xlu0 %902
  %904 = vrot.lane.b32.xlu0 %v254, 112
  %v905 = vpop.permute.xlu0 %904
  %906 = vrot.lane.b32.xlu0 %v257, 112
  %v907 = vpop.permute.xlu0 %906
  %v917 = vsel %vm513, %v864, 0
  %v920 = vsel %vm513, %v865, 0
  %v923 = vsel %vm513, %v866, 0
  %v926 = vsel %vm513, %v867, 0
  %928 = vmatprep.subr.bf16.mxu0 0
  %929 = vmatpush1.bf16.msra.mxu0 %v873
  %930 = vmatprep.subr.bf16.mxu0 0
  %931 = vmatpush1.bf16.msra.mxu0 %v875
  %932 = vmatprep.subr.bf16.mxu0 0
  %933 = vmatpush1.bf16.msra.mxu0 %v877
  %934 = vmatprep.subr.bf16.mxu0 0
  %935 = vmatpush1.bf16.msra.mxu0 %v879
  %936 = vmatprep.subr.bf16.mxu0 0
  %937 = vmatpush1.bf16.msra.mxu0 0
  %938 = vmatprep.subr.bf16.mxu0 0
  %939 = vmatpush1.bf16.msra.mxu0 0
  %940 = vmatprep.subr.bf16.mxu0 0
  %941 = vmatpush1.bf16.msra.mxu0 0
  %942 = vmatprep.subr.bf16.mxu0 0
  %943 = vmatpush1.bf16.msra.mxu0 0
  %944 = vmatprep.subr.bf16.mxu0 0
  %945 = vmatpush1.bf16.msra.mxu0 0
  %946 = vmatprep.subr.bf16.mxu0 0
  %947 = vmatpush1.bf16.msra.mxu0 0
  %948 = vmatprep.subr.bf16.mxu0 0
  %949 = vmatpush1.bf16.msra.mxu0 0
  %950 = vmatprep.subr.bf16.mxu0 0
  %951 = vmatpush1.bf16.msra.mxu0 0
  %952 = vmatprep.subr.bf16.mxu0 0
  %953 = vmatpush1.bf16.msra.mxu0 0
  %954 = vmatprep.subr.bf16.mxu0 0
  %955 = vmatpush1.bf16.msra.mxu0 0
  %956 = vmatprep.subr.bf16.mxu0 0
  %957 = vmatpush1.bf16.msra.mxu0 0
  %958 = vmatprep.subr.bf16.mxu0 0
  %959 = vmatpush1.bf16.msra.mxu0 0
  %960 = vmatprep.mubr.bf16.mxu0 0
  %961 = vmatmul.mubr.bf16.gmra.mrb[0].mxu0 %v917
  %v962 = vpop.f32.mrb[0].mxu0
  %v963 = vadd.f32 %v893, %v962
  %v964 = vpop.f32.mrb[0].mxu0
  %v965 = vpop.f32.mrb[0].mxu0
  %v966 = vadd.f32 %v895, %v965
  %v967 = vpop.f32.mrb[0].mxu0
  %968 = vmatprep.mubr.bf16.mxu0 0
  %969 = vmatmul.mubr.bf16.gmra.mrb[0].mxu0 %v920
  %v970 = vpop.f32.mrb[0].mxu0
  %v971 = vadd.f32 %v897, %v970
  %v972 = vpop.f32.mrb[0].mxu0
  %v973 = vpop.f32.mrb[0].mxu0
  %v974 = vadd.f32 %v899, %v973
  %v975 = vpop.f32.mrb[0].mxu0
  %976 = vmatprep.mubr.bf16.mxu0 0
  %977 = vmatmul.mubr.bf16.gmra.mrb[0].mxu0 %v923
  %v978 = vpop.f32.mrb[0].mxu0
  %v979 = vadd.f32 %v901, %v978
  %v980 = vpop.f32.mrb[0].mxu0
  %v981 = vpop.f32.mrb[0].mxu0
  %v982 = vadd.f32 %v903, %v981
  %v983 = vpop.f32.mrb[0].mxu0
  %984 = vmatprep.mubr.bf16.mxu0 0
  %985 = vmatmul.mubr.bf16.gmra.mrb[0].mxu0 %v926
  %v986 = vpop.f32.mrb[0].mxu0
  %v987 = vadd.f32 %v905, %v986
  %v988 = vpop.f32.mrb[0].mxu0
  %v989 = vpop.f32.mrb[0].mxu0
  %v990 = vadd.f32 %v907, %v989
  %v991 = vpop.f32.mrb[0].mxu0
  %992 = vdwg.mxu0
  %v993 = vmax.f32 %v963, 0.0
  %v994 = vmax.f32 %v966, 0.0
  %v995 = vmax.f32 %v971, 0.0
  %v996 = vmax.f32 %v974, 0.0
  %v997 = vmax.f32 %v979, 0.0
  %v998 = vmax.f32 %v982, 0.0
  %v999 = vmax.f32 %v987, 0.0
  %v1000 = vmax.f32 %v990, 0.0
  %1009 = vrot.lane.b32.xlu0 %v993, 16
  %v1010 = vpop.permute.xlu0 %1009
  %1011 = vrot.lane.b32.xlu0 %v994, 16
  %v1012 = vpop.permute.xlu0 %1011
  %1013 = vrot.lane.b32.xlu0 %v995, 16
  %v1014 = vpop.permute.xlu0 %1013
  %1015 = vrot.lane.b32.xlu0 %v996, 16
  %v1016 = vpop.permute.xlu0 %1015
  %1017 = vrot.lane.b32.xlu0 %v997, 16
  %v1018 = vpop.permute.xlu0 %1017
  %1019 = vrot.lane.b32.xlu0 %v998, 16
  %v1020 = vpop.permute.xlu0 %1019
  %1021 = vrot.lane.b32.xlu0 %v999, 16
  %v1022 = vpop.permute.xlu0 %1021
  %1023 = vrot.lane.b32.xlu0 %v1000, 16
  %v1024 = vpop.permute.xlu0 %1023
  %vm1033 = vcmask 261248
  %1034 = vst.msk [vmem:[#allocation2] sm:$0xff] %vm1033, %v1010
  %1035 = vst.msk [vmem:[#allocation2 + $0x8] sm:$0xff] %vm1033, %v1012
  %1036 = vst.msk [vmem:[#allocation2 + $0x10] sm:$0xff] %vm1033, %v1014
  %1037 = vst.msk [vmem:[#allocation2 + $0x18] sm:$0xff] %vm1033, %v1016
  %1038 = vst.msk [vmem:[#allocation2 + $0x20] sm:$0xff] %vm1033, %v1018
  %1039 = vst.msk [vmem:[#allocation2 + $0x28] sm:$0xff] %vm1033, %v1020
  %1040 = vst.msk [vmem:[#allocation2 + $0x30] sm:$0xff] %vm1033, %v1022
  %1041 = vst.msk [vmem:[#allocation2 + $0x38] sm:$0xff] %vm1033, %v1024
  %v1042 = vld [vmem:[#allocation2] sm:$0xff]
  %v1043 = vld [vmem:[#allocation2 + $0x8] sm:$0xff]
  %v1044 = vld [vmem:[#allocation2 + $0x10] sm:$0xff]
  %v1045 = vld [vmem:[#allocation2 + $0x18] sm:$0xff]
  %v1046 = vld [vmem:[#allocation2 + $0x20] sm:$0xff]
  %v1047 = vld [vmem:[#allocation2 + $0x28] sm:$0xff]
  %v1048 = vld [vmem:[#allocation2 + $0x30] sm:$0xff]
  %v1049 = vld [vmem:[#allocation2 + $0x38] sm:$0xff]
  %v1050 = vpack.c.bf16 %v1043, %v1042
  %v1051 = vpack.c.bf16 %v1045, %v1044
  %v1052 = vpack.c.bf16 %v1047, %v1046
  %v1053 = vpack.c.bf16 %v1049, %v1048
  %v1054 = vld [vmem:[%s6] sm:$0xf]
  %v1055 = vld [vmem:[%s6 + $0x4] sm:$0xf]
  %v1056 = vld [vmem:[%s6 + $0x8] sm:$0xf]
  %v1057 = vld [vmem:[%s6 + $0xc] sm:$0xf]
  %v1062 = vunpack.c.l.b16 %v1054
  %v1063 = vunpack.c.l.b16 %v1055
  %v1064 = vunpack.c.l.b16 %v1056
  %v1065 = vunpack.c.l.b16 %v1057
  %v1066 = vpack.c.b16 %v1063, %v1062
  %v1067 = vpack.c.b16 %v1065, %v1064
  %v1071 = vsel %vm94, %v1050, 0
  %v1074 = vsel %vm94, %v1051, 0
  %v1077 = vsel %vm94, %v1052, 0
  %v1080 = vsel %vm94, %v1053, 0
  %1082 = vmatprep.subr.bf16.mxu0 0
  %1083 = vmatpush1.bf16.msra.mxu0 %v1066
  %1084 = vmatprep.subr.bf16.mxu0 0
  %1085 = vmatpush1.bf16.msra.mxu0 %v1067
  %1086 = vmatprep.subr.bf16.mxu0 0
  %1087 = vmatpush1.bf16.msra.mxu0 0
  %1088 = vmatprep.subr.bf16.mxu0 0
  %1089 = vmatpush1.bf16.msra.mxu0 0
  %1090 = vmatprep.subr.bf16.mxu0 0
  %1091 = vmatpush1.bf16.msra.mxu0 0
  %1092 = vmatprep.subr.bf16.mxu0 0
  %1093 = vmatpush1.bf16.msra.mxu0 0
  %1094 = vmatprep.subr.bf16.mxu0 0
  %1095 = vmatpush1.bf16.msra.mxu0 0
  %1096 = vmatprep.subr.bf16.mxu0 0
  %1097 = vmatpush1.bf16.msra.mxu0 0
  %1098 = vmatprep.subr.bf16.mxu0 0
  %1099 = vmatpush1.bf16.msra.mxu0 0
  %1100 = vmatprep.subr.bf16.mxu0 0
  %1101 = vmatpush1.bf16.msra.mxu0 0
  %1102 = vmatprep.subr.bf16.mxu0 0
  %1103 = vmatpush1.bf16.msra.mxu0 0
  %1104 = vmatprep.subr.bf16.mxu0 0
  %1105 = vmatpush1.bf16.msra.mxu0 0
  %1106 = vmatprep.subr.bf16.mxu0 0
  %1107 = vmatpush1.bf16.msra.mxu0 0
  %1108 = vmatprep.subr.bf16.mxu0 0
  %1109 = vmatpush1.bf16.msra.mxu0 0
  %1110 = vmatprep.subr.bf16.mxu0 0
  %1111 = vmatpush1.bf16.msra.mxu0 0
  %1112 = vmatprep.subr.bf16.mxu0 0
  %1113 = vmatpush1.bf16.msra.mxu0 0
  %1114 = vmatprep.mubr.bf16.mxu0 0
  %1115 = vmatmul.mubr.bf16.gmra.mrb[0].mxu0 %v1071
  %v1116 = vpop.f32.mrb[0].mxu0
  %v1117 = vadd.f32 0.0, %v1116
  %v1118 = vpop.f32.mrb[0].mxu0
  %v1119 = vpop.f32.mrb[0].mxu0
  %v1120 = vadd.f32 0.0, %v1119
  %v1121 = vpop.f32.mrb[0].mxu0
  %1122 = vmatprep.mubr.bf16.mxu0 0
  %1123 = vmatmul.mubr.bf16.gmra.mrb[0].mxu0 %v1074
  %v1124 = vpop.f32.mrb[0].mxu0
  %v1125 = vadd.f32 0.0, %v1124
  %v1126 = vpop.f32.mrb[0].mxu0
  %v1127 = vpop.f32.mrb[0].mxu0
  %v1128 = vadd.f32 0.0, %v1127
  %v1129 = vpop.f32.mrb[0].mxu0
  %1130 = vmatprep.mubr.bf16.mxu0 0
  %1131 = vmatmul.mubr.bf16.gmra.mrb[0].mxu0 %v1077
  %v1132 = vpop.f32.mrb[0].mxu0
  %v1133 = vadd.f32 0.0, %v1132
  %v1134 = vpop.f32.mrb[0].mxu0
  %v1135 = vpop.f32.mrb[0].mxu0
  %v1136 = vadd.f32 0.0, %v1135
  %v1137 = vpop.f32.mrb[0].mxu0
  %1138 = vmatprep.mubr.bf16.mxu0 0
  %1139 = vmatmul.mubr.bf16.gmra.mrb[0].mxu0 %v1080
  %v1140 = vpop.f32.mrb[0].mxu0
  %v1141 = vadd.f32 0.0, %v1140
  %v1142 = vpop.f32.mrb[0].mxu0
  %v1143 = vpop.f32.mrb[0].mxu0
  %v1144 = vadd.f32 0.0, %v1143
  %v1145 = vpop.f32.mrb[0].mxu0
  %1146 = vdwg.mxu0
  %v1147 = vld [vmem:[%s7] sm:$0xf]
  %v1148 = vld [vmem:[%s7 + $0x4] sm:$0xf]
  %v1149 = vld [vmem:[%s7 + $0x8] sm:$0xf]
  %v1150 = vld [vmem:[%s7 + $0xc] sm:$0xf]
  %v1151 = vld [vmem:[%s8] sm:$0x1]
  %v1153 = vlaneseq
  %v1154 = vshrl.u32 %v1153, 7
  %v1155 = vsub.s32 0, %v1154
  %v1156 = vrot.slane %v1151, %v1155
  %v1162 = vunpack.c.l.b16 %v1147
  %v1163 = vunpack.c.l.b16 %v1148
  %v1164 = vunpack.c.l.b16 %v1149
  %v1165 = vunpack.c.l.b16 %v1150
  %v1166 = vpack.c.b16 %v1163, %v1162
  %v1167 = vpack.c.b16 %v1165, %v1164
  %1170 = vmatprep.subr.bf16.mxu0 0
  %1171 = vmatpush1.bf16.msra.mxu0 %v1166
  %1172 = vmatprep.subr.bf16.mxu0 0
  %1173 = vmatpush1.bf16.msra.mxu0 %v1167
  %1174 = vmatprep.subr.bf16.mxu0 0
  %1175 = vmatpush1.bf16.msra.mxu0 0
  %1176 = vmatprep.subr.bf16.mxu0 0
  %1177 = vmatpush1.bf16.msra.mxu0 0
  %1178 = vmatprep.subr.bf16.mxu0 0
  %1179 = vmatpush1.bf16.msra.mxu0 0
  %1180 = vmatprep.subr.bf16.mxu0 0
  %1181 = vmatpush1.bf16.msra.mxu0 0
  %1182 = vmatprep.subr.bf16.mxu0 0
  %1183 = vmatpush1.bf16.msra.mxu0 0
  %1184 = vmatprep.subr.bf16.mxu0 0
  %1185 = vmatpush1.bf16.msra.mxu0 0
  %1186 = vmatprep.subr.bf16.mxu0 0
  %1187 = vmatpush1.bf16.msra.mxu0 0
  %1188 = vmatprep.subr.bf16.mxu0 0
  %1189 = vmatpush1.bf16.msra.mxu0 0
  %1190 = vmatprep.subr.bf16.mxu0 0
  %1191 = vmatpush1.bf16.msra.mxu0 0
  %1192 = vmatprep.subr.bf16.mxu0 0
  %1193 = vmatpush1.bf16.msra.mxu0 0
  %1194 = vmatprep.subr.bf16.mxu0 0
  %1195 = vmatpush1.bf16.msra.mxu0 0
  %1196 = vmatprep.subr.bf16.mxu0 0
  %1197 = vmatpush1.bf16.msra.mxu0 0
  %1198 = vmatprep.subr.bf16.mxu0 0
  %1199 = vmatpush1.bf16.msra.mxu0 0
  %1200 = vmatprep.subr.bf16.mxu0 0
  %1201 = vmatpush1.bf16.msra.mxu0 0
  %1202 = vmatprep.mubr.bf16.mxu0 0
  %1203 = vmatmul.mubr.bf16.gmra.mrb[0].mxu0 %v1071
  %v1204 = vpop.f32.mrb[0].mxu0
  %v1205 = vadd.f32 %v1156, %v1204
  %v1206 = vpop.f32.mrb[0].mxu0
  %v1207 = vpop.f32.mrb[0].mxu0
  %v1208 = vadd.f32 %v1156, %v1207
  %v1209 = vpop.f32.mrb[0].mxu0
  %1210 = vmatprep.mubr.bf16.mxu0 0
  %1211 = vmatmul.mubr.bf16.gmra.mrb[0].mxu0 %v1074
  %v1212 = vpop.f32.mrb[0].mxu0
  %v1213 = vadd.f32 %v1156, %v1212
  %v1214 = vpop.f32.mrb[0].mxu0
  %v1215 = vpop.f32.mrb[0].mxu0
  %v1216 = vadd.f32 %v1156, %v1215
  %v1217 = vpop.f32.mrb[0].mxu0
  %1218 = vmatprep.mubr.bf16.mxu0 0
  %1219 = vmatmul.mubr.bf16.gmra.mrb[0].mxu0 %v1077
  %v1220 = vpop.f32.mrb[0].mxu0
  %v1221 = vadd.f32 %v1156, %v1220
  %v1222 = vpop.f32.mrb[0].mxu0
  %v1223 = vpop.f32.mrb[0].mxu0
  %v1224 = vadd.f32 %v1156, %v1223
  %v1225 = vpop.f32.mrb[0].mxu0
  %1226 = vmatprep.mubr.bf16.mxu0 0
  %1227 = vmatmul.mubr.bf16.gmra.mrb[0].mxu0 %v1080
  %v1228 = vpop.f32.mrb[0].mxu0
  %v1229 = vadd.f32 %v1156, %v1228
  %v1230 = vpop.f32.mrb[0].mxu0
  %v1231 = vpop.f32.mrb[0].mxu0
  %v1232 = vadd.f32 %v1156, %v1231
  %v1233 = vpop.f32.mrb[0].mxu0
  %1234 = vdwg.mxu0
  %v1235 = vpack.c.bf16 %v1120, %v1117
  %v1236 = vpack.c.bf16 %v1128, %v1125
  %v1237 = vpack.c.bf16 %v1136, %v1133
  %v1238 = vpack.c.bf16 %v1144, %v1141
  %v1239 = vld [vmem:[%s9] sm:$0xff]
  %v1240 = vld [vmem:[%s9 + $0x8] sm:$0xff]
  %v1241 = vld [vmem:[%s9 + $0x10] sm:$0xff]
  %v1242 = vld [vmem:[%s9 + $0x18] sm:$0xff]
  %v1244 = vsel %vm94, %v1042, 0
  %v1247 = vsel %vm94, %v1043, 0
  %v1250 = vsel %vm94, %v1044, 0
  %v1253 = vsel %vm94, %v1045, 0
  %v1256 = vsel %vm94, %v1046, 0
  %v1259 = vsel %vm94, %v1047, 0
  %v1262 = vsel %vm94, %v1048, 0
  %v1265 = vsel %vm94, %v1049, 0
  %1267 = vmatprep.subr.mxu0 0.0
  %1268 = vmatpush1.msra.mxu0 %v1239
  %1269 = vmatprep.subr.mxu0 0.0
  %1270 = vmatpush1.msra.mxu0 %v1240
  %1271 = vmatprep.subr.mxu0 0.0
  %1272 = vmatpush1.msra.mxu0 %v1241
  %1273 = vmatprep.subr.mxu0 0.0
  %1274 = vmatpush1.msra.mxu0 %v1242
  %1275 = vmatprep.subr.mxu0 0.0
  %1276 = vmatpush1.msra.mxu0 0.0
  %1277 = vmatprep.subr.mxu0 0.0
  %1278 = vmatpush1.msra.mxu0 0.0
  %1279 = vmatprep.subr.mxu0 0.0
  %1280 = vmatpush1.msra.mxu0 0.0
  %1281 = vmatprep.subr.mxu0 0.0
  %1282 = vmatpush1.msra.mxu0 0.0
  %1283 = vmatprep.subr.mxu0 0.0
  %1284 = vmatpush1.msra.mxu0 0.0
  %1285 = vmatprep.subr.mxu0 0.0
  %1286 = vmatpush1.msra.mxu0 0.0
  %1287 = vmatprep.subr.mxu0 0.0
  %1288 = vmatpush1.msra.mxu0 0.0
  %1289 = vmatprep.subr.mxu0 0.0
  %1290 = vmatpush1.msra.mxu0 0.0
  %1291 = vmatprep.subr.mxu0 0.0
  %1292 = vmatpush1.msra.mxu0 0.0
  %1293 = vmatprep.subr.mxu0 0.0
  %1294 = vmatpush1.msra.mxu0 0.0
  %1295 = vmatprep.subr.mxu0 0.0
  %1296 = vmatpush1.msra.mxu0 0.0
  %1297 = vmatprep.subr.mxu0 0.0
  %1298 = vmatpush1.msra.mxu0 0.0
  %1299 = vmatprep.subr.mxu0 0.0
  %1300 = vmatpush1.msra.mxu0 0.0
  %1301 = vmatprep.subr.mxu0 0.0
  %1302 = vmatpush1.msra.mxu0 0.0
  %1303 = vmatprep.subr.mxu0 0.0
  %1304 = vmatpush1.msra.mxu0 0.0
  %1305 = vmatprep.subr.mxu0 0.0
  %1306 = vmatpush1.msra.mxu0 0.0
  %1307 = vmatprep.subr.mxu0 0.0
  %1308 = vmatpush1.msra.mxu0 0.0
  %1309 = vmatprep.subr.mxu0 0.0
  %1310 = vmatpush1.msra.mxu0 0.0
  %1311 = vmatprep.subr.mxu0 0.0
  %1312 = vmatpush1.msra.mxu0 0.0
  %1313 = vmatprep.subr.mxu0 0.0
  %1314 = vmatpush1.msra.mxu0 0.0
  %1315 = vmatprep.subr.mxu0 0.0
  %1316 = vmatpush1.msra.mxu0 0.0
  %1317 = vmatprep.subr.mxu0 0.0
  %1318 = vmatpush1.msra.mxu0 0.0
  %1319 = vmatprep.subr.mxu0 0.0
  %1320 = vmatpush1.msra.mxu0 0.0
  %1321 = vmatprep.subr.mxu0 0.0
  %1322 = vmatpush1.msra.mxu0 0.0
  %1323 = vmatprep.subr.mxu0 0.0
  %1324 = vmatpush1.msra.mxu0 0.0
  %1325 = vmatprep.subr.mxu0 0.0
  %1326 = vmatpush1.msra.mxu0 0.0
  %1327 = vmatprep.subr.mxu0 0.0
  %1328 = vmatpush1.msra.mxu0 0.0
  %1329 = vmatprep.subr.mxu0 0.0
  %1330 = vmatpush1.msra.mxu0 0.0
  %1331 = vmatprep.mubr.f32.mxu0 0.0
  %1332 = vmatmul.mubr.f32.gmra.mrb[0].mxu0 %v1244
  %v1333 = vpop.f32.mrb[0].mxu0
  %v1334 = vadd.f32 0.0, %v1333
  %v1335 = vpop.f32.mrb[0].mxu0
  %1336 = vmatprep.mubr.f32.mxu0 0.0
  %1337 = vmatmul.mubr.f32.gmra.mrb[0].mxu0 %v1247
  %v1338 = vpop.f32.mrb[0].mxu0
  %v1339 = vadd.f32 0.0, %v1338
  %v1340 = vpop.f32.mrb[0].mxu0
  %1341 = vmatprep.mubr.f32.mxu0 0.0
  %1342 = vmatmul.mubr.f32.gmra.mrb[0].mxu0 %v1250
  %v1343 = vpop.f32.mrb[0].mxu0
  %v1344 = vadd.f32 0.0, %v1343
  %v1345 = vpop.f32.mrb[0].mxu0
  %1346 = vmatprep.mubr.f32.mxu0 0.0
  %1347 = vmatmul.mubr.f32.gmra.mrb[0].mxu0 %v1253
  %v1348 = vpop.f32.mrb[0].mxu0
  %v1349 = vadd.f32 0.0, %v1348
  %v1350 = vpop.f32.mrb[0].mxu0
  %1351 = vmatprep.mubr.f32.mxu0 0.0
  %1352 = vmatmul.mubr.f32.gmra.mrb[0].mxu0 %v1256
  %v1353 = vpop.f32.mrb[0].mxu0
  %v1354 = vadd.f32 0.0, %v1353
  %v1355 = vpop.f32.mrb[0].mxu0
  %1356 = vmatprep.mubr.f32.mxu0 0.0
  %1357 = vmatmul.mubr.f32.gmra.mrb[0].mxu0 %v1259
  %v1358 = vpop.f32.mrb[0].mxu0
  %v1359 = vadd.f32 0.0, %v1358
  %v1360 = vpop.f32.mrb[0].mxu0
  %1361 = vmatprep.mubr.f32.mxu0 0.0
  %1362 = vmatmul.mubr.f32.gmra.mrb[0].mxu0 %v1262
  %v1363 = vpop.f32.mrb[0].mxu0
  %v1364 = vadd.f32 0.0, %v1363
  %v1365 = vpop.f32.mrb[0].mxu0
  %1366 = vmatprep.mubr.f32.mxu0 0.0
  %1367 = vmatmul.mubr.f32.gmra.mrb[0].mxu0 %v1265
  %v1368 = vpop.f32.mrb[0].mxu0
  %v1369 = vadd.f32 0.0, %v1368
  %v1370 = vpop.f32.mrb[0].mxu0
  %1371 = vdwg.mxu0
  %1372 = vxpose.xlu0.b32.start [1/16] %v1334, 128
  %1373 = vxpose.xlu0.b32.cont [2/16] %v1339, 128
  %1374 = vxpose.xlu0.b32.cont [3/16] %v1344, 128
  %1375 = vxpose.xlu0.b32.cont [4/16] %v1349, 128
  %1376 = vxpose.xlu0.b32.cont [5/16] %v1354, 128
  %1377 = vxpose.xlu0.b32.cont [6/16] %v1359, 128
  %1378 = vxpose.xlu0.b32.cont [7/16] %v1364, 128
  %1379 = vxpose.xlu0.b32.cont [8/16] %v1369, 128
  %1380 = vxpose.xlu0.b32.cont [9/16] 0.0, 128
  %1381 = vxpose.xlu0.b32.cont [10/16] 0.0, 128
  %1382 = vxpose.xlu0.b32.cont [11/16] 0.0, 128
  %1383 = vxpose.xlu0.b32.cont [12/16] 0.0, 128
  %1384 = vxpose.xlu0.b32.cont [13/16] 0.0, 128
  %1385 = vxpose.xlu0.b32.cont [14/16] 0.0, 128
  %1386 = vxpose.xlu0.b32.cont [15/16] 0.0, 128
  %1387 = vxpose.xlu0.b32.end [16/16] 0.0, 128
  %v1388 = vpop.trf.xlu0
  %v1389 = vpop.trf.xlu0
  %v1390 = vpop.trf.xlu0
  %v1391 = vpop.trf.xlu0
  %v1392 = vpop.trf.xlu0
  %v1393 = vpop.trf.xlu0
  %v1394 = vpop.trf.xlu0
  %v1395 = vpop.trf.xlu0
  %v1396 = vpop.trf.xlu0
  %v1397 = vpop.trf.xlu0
  %v1398 = vpop.trf.xlu0
  %v1399 = vpop.trf.xlu0
  %v1400 = vpop.trf.xlu0
  %v1401 = vpop.trf.xlu0
  %v1402 = vpop.trf.xlu0
  %v1403 = vpop.trf.xlu0
  %1405 = vset.pattern.permute.xlu0 2
  %1406 = vperm.xlu0 %1405, %v1334
  %v1407 = vpop.permute.xlu0 %1406
  %1410 = vset.pattern.permute.xlu0 2
  %1411 = vperm.xlu0 %1410, %v1339
  %v1412 = vpop.permute.xlu0 %1411
  %1415 = vset.pattern.permute.xlu0 2
  %1416 = vperm.xlu0 %1415, %v1344
  %v1417 = vpop.permute.xlu0 %1416
  %1420 = vset.pattern.permute.xlu0 2
  %1421 = vperm.xlu0 %1420, %v1349
  %v1422 = vpop.permute.xlu0 %1421
  %1425 = vset.pattern.permute.xlu0 2
  %1426 = vperm.xlu0 %1425, %v1354
  %v1427 = vpop.permute.xlu0 %1426
  %1430 = vset.pattern.permute.xlu0 2
  %1431 = vperm.xlu0 %1430, %v1359
  %v1432 = vpop.permute.xlu0 %1431
  %1435 = vset.pattern.permute.xlu0 2
  %1436 = vperm.xlu0 %1435, %v1364
  %v1437 = vpop.permute.xlu0 %1436
  %1440 = vset.pattern.permute.xlu0 2
  %1441 = vperm.xlu0 %1440, %v1369
  %v1442 = vpop.permute.xlu0 %1441
  %v1444 = vlaneseq
  %v1445 = vshrl.u32 %v1444, 7
  %v1446 = vsub.s32 0, %v1445
  %v1447 = vrot.slane %v1388, %v1446
  %v1448 = vadd.f32 %v1407, %v1447
  %v1449 = vadd.f32 %v1412, %v1447
  %v1450 = vadd.f32 %v1417, %v1447
  %v1451 = vadd.f32 %v1422, %v1447
  %v1452 = vadd.f32 %v1427, %v1447
  %v1453 = vadd.f32 %v1432, %v1447
  %v1454 = vadd.f32 %v1437, %v1447
  %v1455 = vadd.f32 %v1442, %v1447
  %vm1456 = vcmp.ge.f32.partialorder %v1448, 0.0
  %vm1457 = vcmp.ge.f32.partialorder %v1449, 0.0
  %vm1458 = vcmp.ge.f32.partialorder %v1450, 0.0
  %vm1459 = vcmp.ge.f32.partialorder %v1451, 0.0
  %vm1460 = vcmp.ge.f32.partialorder %v1452, 0.0
  %vm1461 = vcmp.ge.f32.partialorder %v1453, 0.0
  %vm1462 = vcmp.ge.f32.partialorder %v1454, 0.0
  %vm1463 = vcmp.ge.f32.partialorder %v1455, 0.0
  %v1464 = vmul.f32 %v1448, 0.2
  %v1465 = vmul.f32 %v1449, 0.2
  %v1466 = vmul.f32 %v1450, 0.2
  %v1467 = vmul.f32 %v1451, 0.2
  %v1468 = vmul.f32 %v1452, 0.2
  %v1469 = vmul.f32 %v1453, 0.2
  %v1470 = vmul.f32 %v1454, 0.2
  %v1471 = vmul.f32 %v1455, 0.2
  %v1472 = vsel %vm1456, %v1448, %v1464
  %v1473 = vsel %vm1457, %v1449, %v1465
  %v1474 = vsel %vm1458, %v1450, %v1466
  %v1475 = vsel %vm1459, %v1451, %v1467
  %v1476 = vsel %vm1460, %v1452, %v1468
  %v1477 = vsel %vm1461, %v1453, %v1469
  %v1478 = vsel %vm1462, %v1454, %v1470
  %v1479 = vsel %vm1463, %v1455, %v1471
  %v1480 = vadd.f32 %v1472, %v58
  %v1481 = vadd.f32 %v1473, %v59
  %v1482 = vadd.f32 %v1474, %v60
  %v1483 = vadd.f32 %v1475, %v61
  %v1484 = vadd.f32 %v1476, %v62
  %v1485 = vadd.f32 %v1477, %v63
  %v1486 = vadd.f32 %v1478, %v64
  %v1487 = vadd.f32 %v1479, %v65
  %v1488 = vsel %vm513, %v1480, -inf
  %1489 = vmax.xlane.f32.xlu0 %v1488
  %v1490 = vpop.xlane.xlu0 %1489
  %v1491 = vsel %vm513, %v1481, -inf
  %1492 = vmax.xlane.f32.xlu0 %v1491
  %v1493 = vpop.xlane.xlu0 %1492
  %v1494 = vsel %vm513, %v1482, -inf
  %1495 = vmax.xlane.f32.xlu0 %v1494
  %v1496 = vpop.xlane.xlu0 %1495
  %v1497 = vsel %vm513, %v1483, -inf
  %1498 = vmax.xlane.f32.xlu0 %v1497
  %v1499 = vpop.xlane.xlu0 %1498
  %v1500 = vsel %vm513, %v1484, -inf
  %1501 = vmax.xlane.f32.xlu0 %v1500
  %v1502 = vpop.xlane.xlu0 %1501
  %v1503 = vsel %vm513, %v1485, -inf
  %1504 = vmax.xlane.f32.xlu0 %v1503
  %v1505 = vpop.xlane.xlu0 %1504
  %v1506 = vsel %vm513, %v1486, -inf
  %1507 = vmax.xlane.f32.xlu0 %v1506
  %v1508 = vpop.xlane.xlu0 %1507
  %v1509 = vsel %vm513, %v1487, -inf
  %1510 = vmax.xlane.f32.xlu0 %v1509
  %v1511 = vpop.xlane.xlu0 %1510
  %v1512 = vsub.f32 %v1480, %v1490
  %v1513 = vsub.f32 %v1481, %v1493
  %v1514 = vsub.f32 %v1482, %v1496
  %v1515 = vsub.f32 %v1483, %v1499
  %v1516 = vsub.f32 %v1484, %v1502
  %v1517 = vsub.f32 %v1485, %v1505
  %v1518 = vsub.f32 %v1486, %v1508
  %v1519 = vsub.f32 %v1487, %v1511
  %v1520 = vmul.f32 %v1512, 1.442695
  %v1521 = vpow.pop %v1520
  %v1522 = vmul.f32 %v1513, 1.442695
  %v1523 = vpow.pop %v1522
  %v1524 = vmul.f32 %v1514, 1.442695
  %v1525 = vpow.pop %v1524
  %v1526 = vmul.f32 %v1515, 1.442695
  %v1527 = vpow.pop %v1526
  %v1528 = vmul.f32 %v1516, 1.442695
  %v1529 = vpow.pop %v1528
  %v1530 = vmul.f32 %v1517, 1.442695
  %v1531 = vpow.pop %v1530
  %v1532 = vmul.f32 %v1518, 1.442695
  %v1533 = vpow.pop %v1532
  %v1534 = vmul.f32 %v1519, 1.442695
  %v1535 = vpow.pop %v1534
  %v1536 = vsel %vm513, %v1521, 0.0
  %1537 = vadd.xlane.f32.xlu0 %v1536
  %v1538 = vpop.xlane.xlu0 %1537
  %v1539 = vsel %vm513, %v1523, 0.0
  %1540 = vadd.xlane.f32.xlu0 %v1539
  %v1541 = vpop.xlane.xlu0 %1540
  %v1542 = vsel %vm513, %v1525, 0.0
  %1543 = vadd.xlane.f32.xlu0 %v1542
  %v1544 = vpop.xlane.xlu0 %1543
  %v1545 = vsel %vm513, %v1527, 0.0
  %1546 = vadd.xlane.f32.xlu0 %v1545
  %v1547 = vpop.xlane.xlu0 %1546
  %v1548 = vsel %vm513, %v1529, 0.0
  %1549 = vadd.xlane.f32.xlu0 %v1548
  %v1550 = vpop.xlane.xlu0 %1549
  %v1551 = vsel %vm513, %v1531, 0.0
  %1552 = vadd.xlane.f32.xlu0 %v1551
  %v1553 = vpop.xlane.xlu0 %1552
  %v1554 = vsel %vm513, %v1533, 0.0
  %1555 = vadd.xlane.f32.xlu0 %v1554
  %v1556 = vpop.xlane.xlu0 %1555
  %v1557 = vsel %vm513, %v1535, 0.0
  %1558 = vadd.xlane.f32.xlu0 %v1557
  %v1559 = vpop.xlane.xlu0 %1558
  %v1560 = vrcp.pop %v1538
  %v1561 = vrcp.pop %v1541
  %v1562 = vrcp.pop %v1544
  %v1563 = vrcp.pop %v1547
  %v1564 = vrcp.pop %v1550
  %v1565 = vrcp.pop %v1553
  %v1566 = vrcp.pop %v1556
  %v1567 = vrcp.pop %v1559
  %v1568 = vmul.f32 %v1521, %v1560
  %v1569 = vmul.f32 %v1523, %v1561
  %v1570 = vmul.f32 %v1525, %v1562
  %v1571 = vmul.f32 %v1527, %v1563
  %v1572 = vmul.f32 %v1529, %v1564
  %v1573 = vmul.f32 %v1531, %v1565
  %v1574 = vmul.f32 %v1533, %v1566
  %v1575 = vmul.f32 %v1535, %v1567
  %v1576 = vpack.c.bf16 %v1569, %v1568
  %v1577 = vpack.c.bf16 %v1571, %v1570
  %v1578 = vpack.c.bf16 %v1573, %v1572
  %v1579 = vpack.c.bf16 %v1575, %v1574
  %v1581 = vsel %vm513, %v1576, 0
  %v1584 = vsel %vm513, %v1577, 0
  %v1587 = vsel %vm513, %v1578, 0
  %v1590 = vsel %vm513, %v1579, 0
  %1592 = vmatprep.subr.bf16.mxu0 0
  %1593 = vmatpush1.bf16.msra.mxu0 %v1235
  %1594 = vmatprep.subr.bf16.mxu0 0
  %1595 = vmatpush1.bf16.msra.mxu0 %v1236
  %1596 = vmatprep.subr.bf16.mxu0 0
  %1597 = vmatpush1.bf16.msra.mxu0 %v1237
  %1598 = vmatprep.subr.bf16.mxu0 0
  %1599 = vmatpush1.bf16.msra.mxu0 %v1238
  %1600 = vmatprep.subr.bf16.mxu0 0
  %1601 = vmatpush1.bf16.msra.mxu0 0
  %1602 = vmatprep.subr.bf16.mxu0 0
  %1603 = vmatpush1.bf16.msra.mxu0 0
  %1604 = vmatprep.subr.bf16.mxu0 0
  %1605 = vmatpush1.bf16.msra.mxu0 0
  %1606 = vmatprep.subr.bf16.mxu0 0
  %1607 = vmatpush1.bf16.msra.mxu0 0
  %1608 = vmatprep.subr.bf16.mxu0 0
  %1609 = vmatpush1.bf16.msra.mxu0 0
  %1610 = vmatprep.subr.bf16.mxu0 0
  %1611 = vmatpush1.bf16.msra.mxu0 0
  %1612 = vmatprep.subr.bf16.mxu0 0
  %1613 = vmatpush1.bf16.msra.mxu0 0
  %1614 = vmatprep.subr.bf16.mxu0 0
  %1615 = vmatpush1.bf16.msra.mxu0 0
  %1616 = vmatprep.subr.bf16.mxu0 0
  %1617 = vmatpush1.bf16.msra.mxu0 0
  %1618 = vmatprep.subr.bf16.mxu0 0
  %1619 = vmatpush1.bf16.msra.mxu0 0
  %1620 = vmatprep.subr.bf16.mxu0 0
  %1621 = vmatpush1.bf16.msra.mxu0 0
  %1622 = vmatprep.subr.bf16.mxu0 0
  %1623 = vmatpush1.bf16.msra.mxu0 0
  %1624 = vmatprep.mubr.bf16.mxu0 0
  %1625 = vmatmul.mubr.bf16.gmra.mrb[0].mxu0 %v1581
  %v1626 = vpop.f32.mrb[0].mxu0
  %v1627 = vadd.f32 %v1205, %v1626
  %v1628 = vpop.f32.mrb[0].mxu0
  %v1629 = vpop.f32.mrb[0].mxu0
  %v1630 = vadd.f32 %v1208, %v1629
  %v1631 = vpop.f32.mrb[0].mxu0
  %1632 = vmatprep.mubr.bf16.mxu0 0
  %1633 = vmatmul.mubr.bf16.gmra.mrb[0].mxu0 %v1584
  %v1634 = vpop.f32.mrb[0].mxu0
  %v1635 = vadd.f32 %v1213, %v1634
  %v1636 = vpop.f32.mrb[0].mxu0
  %v1637 = vpop.f32.mrb[0].mxu0
  %v1638 = vadd.f32 %v1216, %v1637
  %v1639 = vpop.f32.mrb[0].mxu0
  %1640 = vmatprep.mubr.bf16.mxu0 0
  %1641 = vmatmul.mubr.bf16.gmra.mrb[0].mxu0 %v1587
  %v1642 = vpop.f32.mrb[0].mxu0
  %v1643 = vadd.f32 %v1221, %v1642
  %v1644 = vpop.f32.mrb[0].mxu0
  %v1645 = vpop.f32.mrb[0].mxu0
  %v1646 = vadd.f32 %v1224, %v1645
  %v1647 = vpop.f32.mrb[0].mxu0
  %1648 = vmatprep.mubr.bf16.mxu0 0
  %1649 = vmatmul.mubr.bf16.gmra.mrb[0].mxu0 %v1590
  %v1650 = vpop.f32.mrb[0].mxu0
  %v1651 = vadd.f32 %v1229, %v1650
  %v1652 = vpop.f32.mrb[0].mxu0
  %v1653 = vpop.f32.mrb[0].mxu0
  %v1654 = vadd.f32 %v1232, %v1653
  %v1655 = vpop.f32.mrb[0].mxu0
  %1656 = vdwg.mxu0
  %v1657 = vmax.f32 %v1627, 0.0
  %v1658 = vmax.f32 %v1630, 0.0
  %v1659 = vmax.f32 %v1635, 0.0
  %v1660 = vmax.f32 %v1638, 0.0
  %v1661 = vmax.f32 %v1643, 0.0
  %v1662 = vmax.f32 %v1646, 0.0
  %v1663 = vmax.f32 %v1651, 0.0
  %v1664 = vmax.f32 %v1654, 0.0
  %1665 = vst.msk [vmem:[#allocation2] sm:$0xff] %vm691, %v1657
  %1666 = vst.msk [vmem:[#allocation2 + $0x8] sm:$0xff] %vm691, %v1658
  %1667 = vst.msk [vmem:[#allocation2 + $0x10] sm:$0xff] %vm691, %v1659
  %1668 = vst.msk [vmem:[#allocation2 + $0x18] sm:$0xff] %vm691, %v1660
  %1669 = vst.msk [vmem:[#allocation2 + $0x20] sm:$0xff] %vm691, %v1661
  %1670 = vst.msk [vmem:[#allocation2 + $0x28] sm:$0xff] %vm691, %v1662
  %1671 = vst.msk [vmem:[#allocation2 + $0x30] sm:$0xff] %vm691, %v1663
  %1672 = vst.msk [vmem:[#allocation2 + $0x38] sm:$0xff] %vm691, %v1664
  %1673 = vset.pattern.permute.xlu0 3
  %1674 = vperm.xlu0 %1673, %v1334
  %v1675 = vpop.permute.xlu0 %1674
  %1677 = vset.pattern.permute.xlu0 3
  %1678 = vperm.xlu0 %1677, %v1339
  %v1679 = vpop.permute.xlu0 %1678
  %1681 = vset.pattern.permute.xlu0 3
  %1682 = vperm.xlu0 %1681, %v1344
  %v1683 = vpop.permute.xlu0 %1682
  %1685 = vset.pattern.permute.xlu0 3
  %1686 = vperm.xlu0 %1685, %v1349
  %v1687 = vpop.permute.xlu0 %1686
  %1689 = vset.pattern.permute.xlu0 3
  %1690 = vperm.xlu0 %1689, %v1354
  %v1691 = vpop.permute.xlu0 %1690
  %1693 = vset.pattern.permute.xlu0 3
  %1694 = vperm.xlu0 %1693, %v1359
  %v1695 = vpop.permute.xlu0 %1694
  %1697 = vset.pattern.permute.xlu0 3
  %1698 = vperm.xlu0 %1697, %v1364
  %v1699 = vpop.permute.xlu0 %1698
  %1701 = vset.pattern.permute.xlu0 3
  %1702 = vperm.xlu0 %1701, %v1369
  %v1703 = vpop.permute.xlu0 %1702
  %v1705 = vlaneseq
  %v1706 = vshrl.u32 %v1705, 7
  %v1707 = vsub.s32 1, %v1706
  %v1708 = vrot.slane %v1388, %v1707
  %v1709 = vadd.f32 %v1675, %v1708
  %v1710 = vadd.f32 %v1679, %v1708
  %v1711 = vadd.f32 %v1683, %v1708
  %v1712 = vadd.f32 %v1687, %v1708
  %v1713 = vadd.f32 %v1691, %v1708
  %v1714 = vadd.f32 %v1695, %v1708
  %v1715 = vadd.f32 %v1699, %v1708
  %v1716 = vadd.f32 %v1703, %v1708
  %vm1717 = vcmp.ge.f32.partialorder %v1709, 0.0
  %vm1718 = vcmp.ge.f32.partialorder %v1710, 0.0
  %vm1719 = vcmp.ge.f32.partialorder %v1711, 0.0
  %vm1720 = vcmp.ge.f32.partialorder %v1712, 0.0
  %vm1721 = vcmp.ge.f32.partialorder %v1713, 0.0
  %vm1722 = vcmp.ge.f32.partialorder %v1714, 0.0
  %vm1723 = vcmp.ge.f32.partialorder %v1715, 0.0
  %vm1724 = vcmp.ge.f32.partialorder %v1716, 0.0
  %v1725 = vmul.f32 %v1709, 0.2
  %v1726 = vmul.f32 %v1710, 0.2
  %v1727 = vmul.f32 %v1711, 0.2
  %v1728 = vmul.f32 %v1712, 0.2
  %v1729 = vmul.f32 %v1713, 0.2
  %v1730 = vmul.f32 %v1714, 0.2
  %v1731 = vmul.f32 %v1715, 0.2
  %v1732 = vmul.f32 %v1716, 0.2
  %v1733 = vsel %vm1717, %v1709, %v1725
  %v1734 = vsel %vm1718, %v1710, %v1726
  %v1735 = vsel %vm1719, %v1711, %v1727
  %v1736 = vsel %vm1720, %v1712, %v1728
  %v1737 = vsel %vm1721, %v1713, %v1729
  %v1738 = vsel %vm1722, %v1714, %v1730
  %v1739 = vsel %vm1723, %v1715, %v1731
  %v1740 = vsel %vm1724, %v1716, %v1732
  %v1741 = vadd.f32 %v1733, %v58
  %v1742 = vadd.f32 %v1734, %v59
  %v1743 = vadd.f32 %v1735, %v60
  %v1744 = vadd.f32 %v1736, %v61
  %v1745 = vadd.f32 %v1737, %v62
  %v1746 = vadd.f32 %v1738, %v63
  %v1747 = vadd.f32 %v1739, %v64
  %v1748 = vadd.f32 %v1740, %v65
  %v1749 = vsel %vm513, %v1741, -inf
  %1750 = vmax.xlane.f32.xlu0 %v1749
  %v1751 = vpop.xlane.xlu0 %1750
  %v1752 = vsel %vm513, %v1742, -inf
  %1753 = vmax.xlane.f32.xlu0 %v1752
  %v1754 = vpop.xlane.xlu0 %1753
  %v1755 = vsel %vm513, %v1743, -inf
  %1756 = vmax.xlane.f32.xlu0 %v1755
  %v1757 = vpop.xlane.xlu0 %1756
  %v1758 = vsel %vm513, %v1744, -inf
  %1759 = vmax.xlane.f32.xlu0 %v1758
  %v1760 = vpop.xlane.xlu0 %1759
  %v1761 = vsel %vm513, %v1745, -inf
  %1762 = vmax.xlane.f32.xlu0 %v1761
  %v1763 = vpop.xlane.xlu0 %1762
  %v1764 = vsel %vm513, %v1746, -inf
  %1765 = vmax.xlane.f32.xlu0 %v1764
  %v1766 = vpop.xlane.xlu0 %1765
  %v1767 = vsel %vm513, %v1747, -inf
  %1768 = vmax.xlane.f32.xlu0 %v1767
  %v1769 = vpop.xlane.xlu0 %1768
  %v1770 = vsel %vm513, %v1748, -inf
  %1771 = vmax.xlane.f32.xlu0 %v1770
  %v1772 = vpop.xlane.xlu0 %1771
  %v1773 = vsub.f32 %v1741, %v1751
  %v1774 = vsub.f32 %v1742, %v1754
  %v1775 = vsub.f32 %v1743, %v1757
  %v1776 = vsub.f32 %v1744, %v1760
  %v1777 = vsub.f32 %v1745, %v1763
  %v1778 = vsub.f32 %v1746, %v1766
  %v1779 = vsub.f32 %v1747, %v1769
  %v1780 = vsub.f32 %v1748, %v1772
  %v1781 = vmul.f32 %v1773, 1.442695
  %v1782 = vpow.pop %v1781
  %v1783 = vmul.f32 %v1774, 1.442695
  %v1784 = vpow.pop %v1783
  %v1785 = vmul.f32 %v1775, 1.442695
  %v1786 = vpow.pop %v1785
  %v1787 = vmul.f32 %v1776, 1.442695
  %v1788 = vpow.pop %v1787
  %v1789 = vmul.f32 %v1777, 1.442695
  %v1790 = vpow.pop %v1789
  %v1791 = vmul.f32 %v1778, 1.442695
  %v1792 = vpow.pop %v1791
  %v1793 = vmul.f32 %v1779, 1.442695
  %v1794 = vpow.pop %v1793
  %v1795 = vmul.f32 %v1780, 1.442695
  %v1796 = vpow.pop %v1795
  %v1797 = vsel %vm513, %v1782, 0.0
  %1798 = vadd.xlane.f32.xlu0 %v1797
  %v1799 = vpop.xlane.xlu0 %1798
  %v1800 = vsel %vm513, %v1784, 0.0
  %1801 = vadd.xlane.f32.xlu0 %v1800
  %v1802 = vpop.xlane.xlu0 %1801
  %v1803 = vsel %vm513, %v1786, 0.0
  %1804 = vadd.xlane.f32.xlu0 %v1803
  %v1805 = vpop.xlane.xlu0 %1804
  %v1806 = vsel %vm513, %v1788, 0.0
  %1807 = vadd.xlane.f32.xlu0 %v1806
  %v1808 = vpop.xlane.xlu0 %1807
  %v1809 = vsel %vm513, %v1790, 0.0
  %1810 = vadd.xlane.f32.xlu0 %v1809
  %v1811 = vpop.xlane.xlu0 %1810
  %v1812 = vsel %vm513, %v1792, 0.0
  %1813 = vadd.xlane.f32.xlu0 %v1812
  %v1814 = vpop.xlane.xlu0 %1813
  %v1815 = vsel %vm513, %v1794, 0.0
  %1816 = vadd.xlane.f32.xlu0 %v1815
  %v1817 = vpop.xlane.xlu0 %1816
  %v1818 = vsel %vm513, %v1796, 0.0
  %1819 = vadd.xlane.f32.xlu0 %v1818
  %v1820 = vpop.xlane.xlu0 %1819
  %v1821 = vrcp.pop %v1799
  %v1822 = vrcp.pop %v1802
  %v1823 = vrcp.pop %v1805
  %v1824 = vrcp.pop %v1808
  %v1825 = vrcp.pop %v1811
  %v1826 = vrcp.pop %v1814
  %v1827 = vrcp.pop %v1817
  %v1828 = vrcp.pop %v1820
  %v1829 = vmul.f32 %v1782, %v1821
  %v1830 = vmul.f32 %v1784, %v1822
  %v1831 = vmul.f32 %v1786, %v1823
  %v1832 = vmul.f32 %v1788, %v1824
  %v1833 = vmul.f32 %v1790, %v1825
  %v1834 = vmul.f32 %v1792, %v1826
  %v1835 = vmul.f32 %v1794, %v1827
  %v1836 = vmul.f32 %v1796, %v1828
  %v1837 = vpack.c.bf16 %v1830, %v1829
  %v1838 = vpack.c.bf16 %v1832, %v1831
  %v1839 = vpack.c.bf16 %v1834, %v1833
  %v1840 = vpack.c.bf16 %v1836, %v1835
  %1845 = vrot.lane.b32.xlu0 %v1235, 112
  %v1846 = vpop.permute.xlu0 %1845
  %1847 = vrot.lane.b32.xlu0 %v1236, 112
  %v1848 = vpop.permute.xlu0 %1847
  %1849 = vrot.lane.b32.xlu0 %v1237, 112
  %v1850 = vpop.permute.xlu0 %1849
  %1851 = vrot.lane.b32.xlu0 %v1238, 112
  %v1852 = vpop.permute.xlu0 %1851
  %1865 = vrot.lane.b32.xlu0 %v1205, 112
  %v1866 = vpop.permute.xlu0 %1865
  %1867 = vrot.lane.b32.xlu0 %v1208, 112
  %v1868 = vpop.permute.xlu0 %1867
  %1869 = vrot.lane.b32.xlu0 %v1213, 112
  %v1870 = vpop.permute.xlu0 %1869
  %1871 = vrot.lane.b32.xlu0 %v1216, 112
  %v1872 = vpop.permute.xlu0 %1871
  %1873 = vrot.lane.b32.xlu0 %v1221, 112
  %v1874 = vpop.permute.xlu0 %1873
  %1875 = vrot.lane.b32.xlu0 %v1224, 112
  %v1876 = vpop.permute.xlu0 %1875
  %1877 = vrot.lane.b32.xlu0 %v1229, 112
  %v1878 = vpop.permute.xlu0 %1877
  %1879 = vrot.lane.b32.xlu0 %v1232, 112
  %v1880 = vpop.permute.xlu0 %1879
  %v1890 = vsel %vm513, %v1837, 0
  %v1893 = vsel %vm513, %v1838, 0
  %v1896 = vsel %vm513, %v1839, 0
  %v1899 = vsel %vm513, %v1840, 0
  %1901 = vmatprep.subr.bf16.mxu0 0
  %1902 = vmatpush1.bf16.msra.mxu0 %v1846
  %1903 = vmatprep.subr.bf16.mxu0 0
  %1904 = vmatpush1.bf16.msra.mxu0 %v1848
  %1905 = vmatprep.subr.bf16.mxu0 0
  %1906 = vmatpush1.bf16.msra.mxu0 %v1850
  %1907 = vmatprep.subr.bf16.mxu0 0
  %1908 = vmatpush1.bf16.msra.mxu0 %v1852
  %1909 = vmatprep.subr.bf16.mxu0 0
  %1910 = vmatpush1.bf16.msra.mxu0 0
  %1911 = vmatprep.subr.bf16.mxu0 0
  %1912 = vmatpush1.bf16.msra.mxu0 0
  %1913 = vmatprep.subr.bf16.mxu0 0
  %1914 = vmatpush1.bf16.msra.mxu0 0
  %1915 = vmatprep.subr.bf16.mxu0 0
  %1916 = vmatpush1.bf16.msra.mxu0 0
  %1917 = vmatprep.subr.bf16.mxu0 0
  %1918 = vmatpush1.bf16.msra.mxu0 0
  %1919 = vmatprep.subr.bf16.mxu0 0
  %1920 = vmatpush1.bf16.msra.mxu0 0
  %1921 = vmatprep.subr.bf16.mxu0 0
  %1922 = vmatpush1.bf16.msra.mxu0 0
  %1923 = vmatprep.subr.bf16.mxu0 0
  %1924 = vmatpush1.bf16.msra.mxu0 0
  %1925 = vmatprep.subr.bf16.mxu0 0
  %1926 = vmatpush1.bf16.msra.mxu0 0
  %1927 = vmatprep.subr.bf16.mxu0 0
  %1928 = vmatpush1.bf16.msra.mxu0 0
  %1929 = vmatprep.subr.bf16.mxu0 0
  %1930 = vmatpush1.bf16.msra.mxu0 0
  %1931 = vmatprep.subr.bf16.mxu0 0
  %1932 = vmatpush1.bf16.msra.mxu0 0
  %1933 = vmatprep.mubr.bf16.mxu0 0
  %1934 = vmatmul.mubr.bf16.gmra.mrb[0].mxu0 %v1890
  %v1935 = vpop.f32.mrb[0].mxu0
  %v1936 = vadd.f32 %v1866, %v1935
  %v1937 = vpop.f32.mrb[0].mxu0
  %v1938 = vpop.f32.mrb[0].mxu0
  %v1939 = vadd.f32 %v1868, %v1938
  %v1940 = vpop.f32.mrb[0].mxu0
  %1941 = vmatprep.mubr.bf16.mxu0 0
  %1942 = vmatmul.mubr.bf16.gmra.mrb[0].mxu0 %v1893
  %v1943 = vpop.f32.mrb[0].mxu0
  %v1944 = vadd.f32 %v1870, %v1943
  %v1945 = vpop.f32.mrb[0].mxu0
  %v1946 = vpop.f32.mrb[0].mxu0
  %v1947 = vadd.f32 %v1872, %v1946
  %v1948 = vpop.f32.mrb[0].mxu0
  %1949 = vmatprep.mubr.bf16.mxu0 0
  %1950 = vmatmul.mubr.bf16.gmra.mrb[0].mxu0 %v1896
  %v1951 = vpop.f32.mrb[0].mxu0
  %v1952 = vadd.f32 %v1874, %v1951
  %v1953 = vpop.f32.mrb[0].mxu0
  %v1954 = vpop.f32.mrb[0].mxu0
  %v1955 = vadd.f32 %v1876, %v1954
  %v1956 = vpop.f32.mrb[0].mxu0
  %1957 = vmatprep.mubr.bf16.mxu0 0
  %1958 = vmatmul.mubr.bf16.gmra.mrb[0].mxu0 %v1899
  %v1959 = vpop.f32.mrb[0].mxu0
  %v1960 = vadd.f32 %v1878, %v1959
  %v1961 = vpop.f32.mrb[0].mxu0
  %v1962 = vpop.f32.mrb[0].mxu0
  %v1963 = vadd.f32 %v1880, %v1962
  %v1964 = vpop.f32.mrb[0].mxu0
  %1965 = vdwg.mxu0
  %v1966 = vmax.f32 %v1936, 0.0
  %v1967 = vmax.f32 %v1939, 0.0
  %v1968 = vmax.f32 %v1944, 0.0
  %v1969 = vmax.f32 %v1947, 0.0
  %v1970 = vmax.f32 %v1952, 0.0
  %v1971 = vmax.f32 %v1955, 0.0
  %v1972 = vmax.f32 %v1960, 0.0
  %v1973 = vmax.f32 %v1963, 0.0
  %1982 = vrot.lane.b32.xlu0 %v1966, 16
  %v1983 = vpop.permute.xlu0 %1982
  %1984 = vrot.lane.b32.xlu0 %v1967, 16
  %v1985 = vpop.permute.xlu0 %1984
  %1986 = vrot.lane.b32.xlu0 %v1968, 16
  %v1987 = vpop.permute.xlu0 %1986
  %1988 = vrot.lane.b32.xlu0 %v1969, 16
  %v1989 = vpop.permute.xlu0 %1988
  %1990 = vrot.lane.b32.xlu0 %v1970, 16
  %v1991 = vpop.permute.xlu0 %1990
  %1992 = vrot.lane.b32.xlu0 %v1971, 16
  %v1993 = vpop.permute.xlu0 %1992
  %1994 = vrot.lane.b32.xlu0 %v1972, 16
  %v1995 = vpop.permute.xlu0 %1994
  %1996 = vrot.lane.b32.xlu0 %v1973, 16
  %v1997 = vpop.permute.xlu0 %1996
  %2006 = vst.msk [vmem:[#allocation2] sm:$0xff] %vm1033, %v1983
  %2007 = vst.msk [vmem:[#allocation2 + $0x8] sm:$0xff] %vm1033, %v1985
  %2008 = vst.msk [vmem:[#allocation2 + $0x10] sm:$0xff] %vm1033, %v1987
  %2009 = vst.msk [vmem:[#allocation2 + $0x18] sm:$0xff] %vm1033, %v1989
  %2010 = vst.msk [vmem:[#allocation2 + $0x20] sm:$0xff] %vm1033, %v1991
  %2011 = vst.msk [vmem:[#allocation2 + $0x28] sm:$0xff] %vm1033, %v1993
  %2012 = vst.msk [vmem:[#allocation2 + $0x30] sm:$0xff] %vm1033, %v1995
  %2013 = vst.msk [vmem:[#allocation2 + $0x38] sm:$0xff] %vm1033, %v1997
  %v2014 = vld [vmem:[#allocation2] sm:$0xff]
  %v2015 = vld [vmem:[#allocation2 + $0x8] sm:$0xff]
  %v2016 = vld [vmem:[#allocation2 + $0x10] sm:$0xff]
  %v2017 = vld [vmem:[#allocation2 + $0x18] sm:$0xff]
  %v2018 = vld [vmem:[#allocation2 + $0x20] sm:$0xff]
  %v2019 = vld [vmem:[#allocation2 + $0x28] sm:$0xff]
  %v2020 = vld [vmem:[#allocation2 + $0x30] sm:$0xff]
  %v2021 = vld [vmem:[#allocation2 + $0x38] sm:$0xff]
  %v2022 = vld [vmem:[%s10] sm:$0xff]
  %v2023 = vld [vmem:[%s10 + $0x8] sm:$0xff]
  %v2024 = vld [vmem:[%s10 + $0x10] sm:$0xff]
  %v2025 = vld [vmem:[%s10 + $0x18] sm:$0xff]
  %v2026 = vld [vmem:[%s11] sm:$0x1]
  %v2028 = vlaneseq
  %v2029 = vshrl.u32 %v2028, 7
  %v2030 = vsub.s32 0, %v2029
  %v2031 = vrot.slane %v2026, %v2030
  %v2034 = vsel %vm94, %v2014, 0
  %v2037 = vsel %vm94, %v2015, 0
  %v2040 = vsel %vm94, %v2016, 0
  %v2043 = vsel %vm94, %v2017, 0
  %v2046 = vsel %vm94, %v2018, 0
  %v2049 = vsel %vm94, %v2019, 0
  %v2052 = vsel %vm94, %v2020, 0
  %v2055 = vsel %vm94, %v2021, 0
  %2057 = vmatprep.subr.mxu0 0.0
  %2058 = vmatpush1.msra.mxu0 %v2022
  %2059 = vmatprep.subr.mxu0 0.0
  %2060 = vmatpush1.msra.mxu0 %v2023
  %2061 = vmatprep.subr.mxu0 0.0
  %2062 = vmatpush1.msra.mxu0 %v2024
  %2063 = vmatprep.subr.mxu0 0.0
  %2064 = vmatpush1.msra.mxu0 %v2025
  %2065 = vmatprep.subr.mxu0 0.0
  %2066 = vmatpush1.msra.mxu0 0.0
  %2067 = vmatprep.subr.mxu0 0.0
  %2068 = vmatpush1.msra.mxu0 0.0
  %2069 = vmatprep.subr.mxu0 0.0
  %2070 = vmatpush1.msra.mxu0 0.0
  %2071 = vmatprep.subr.mxu0 0.0
  %2072 = vmatpush1.msra.mxu0 0.0
  %2073 = vmatprep.subr.mxu0 0.0
  %2074 = vmatpush1.msra.mxu0 0.0
  %2075 = vmatprep.subr.mxu0 0.0
  %2076 = vmatpush1.msra.mxu0 0.0
  %2077 = vmatprep.subr.mxu0 0.0
  %2078 = vmatpush1.msra.mxu0 0.0
  %2079 = vmatprep.subr.mxu0 0.0
  %2080 = vmatpush1.msra.mxu0 0.0
  %2081 = vmatprep.subr.mxu0 0.0
  %2082 = vmatpush1.msra.mxu0 0.0
  %2083 = vmatprep.subr.mxu0 0.0
  %2084 = vmatpush1.msra.mxu0 0.0
  %2085 = vmatprep.subr.mxu0 0.0
  %2086 = vmatpush1.msra.mxu0 0.0
  %2087 = vmatprep.subr.mxu0 0.0
  %2088 = vmatpush1.msra.mxu0 0.0
  %2089 = vmatprep.subr.mxu0 0.0
  %2090 = vmatpush1.msra.mxu0 0.0
  %2091 = vmatprep.subr.mxu0 0.0
  %2092 = vmatpush1.msra.mxu0 0.0
  %2093 = vmatprep.subr.mxu0 0.0
  %2094 = vmatpush1.msra.mxu0 0.0
  %2095 = vmatprep.subr.mxu0 0.0
  %2096 = vmatpush1.msra.mxu0 0.0
  %2097 = vmatprep.subr.mxu0 0.0
  %2098 = vmatpush1.msra.mxu0 0.0
  %2099 = vmatprep.subr.mxu0 0.0
  %2100 = vmatpush1.msra.mxu0 0.0
  %2101 = vmatprep.subr.mxu0 0.0
  %2102 = vmatpush1.msra.mxu0 0.0
  %2103 = vmatprep.subr.mxu0 0.0
  %2104 = vmatpush1.msra.mxu0 0.0
  %2105 = vmatprep.subr.mxu0 0.0
  %2106 = vmatpush1.msra.mxu0 0.0
  %2107 = vmatprep.subr.mxu0 0.0
  %2108 = vmatpush1.msra.mxu0 0.0
  %2109 = vmatprep.subr.mxu0 0.0
  %2110 = vmatpush1.msra.mxu0 0.0
  %2111 = vmatprep.subr.mxu0 0.0
  %2112 = vmatpush1.msra.mxu0 0.0
  %2113 = vmatprep.subr.mxu0 0.0
  %2114 = vmatpush1.msra.mxu0 0.0
  %2115 = vmatprep.subr.mxu0 0.0
  %2116 = vmatpush1.msra.mxu0 0.0
  %2117 = vmatprep.subr.mxu0 0.0
  %2118 = vmatpush1.msra.mxu0 0.0
  %2119 = vmatprep.subr.mxu0 0.0
  %2120 = vmatpush1.msra.mxu0 0.0
  %2121 = vmatprep.mubr.f32.mxu0 0.0
  %2122 = vmatmul.mubr.f32.gmra.mrb[0].mxu0 %v2034
  %v2123 = vpop.f32.mrb[0].mxu0
  %v2124 = vadd.f32 %v2031, %v2123
  %v2125 = vpop.f32.mrb[0].mxu0
  %2126 = vmatprep.mubr.f32.mxu0 0.0
  %2127 = vmatmul.mubr.f32.gmra.mrb[0].mxu0 %v2037
  %v2128 = vpop.f32.mrb[0].mxu0
  %v2129 = vadd.f32 %v2031, %v2128
  %v2130 = vpop.f32.mrb[0].mxu0
  %2131 = vmatprep.mubr.f32.mxu0 0.0
  %2132 = vmatmul.mubr.f32.gmra.mrb[0].mxu0 %v2040
  %v2133 = vpop.f32.mrb[0].mxu0
  %v2134 = vadd.f32 %v2031, %v2133
  %v2135 = vpop.f32.mrb[0].mxu0
  %2136 = vmatprep.mubr.f32.mxu0 0.0
  %2137 = vmatmul.mubr.f32.gmra.mrb[0].mxu0 %v2043
  %v2138 = vpop.f32.mrb[0].mxu0
  %v2139 = vadd.f32 %v2031, %v2138
  %v2140 = vpop.f32.mrb[0].mxu0
  %2141 = vmatprep.mubr.f32.mxu0 0.0
  %2142 = vmatmul.mubr.f32.gmra.mrb[0].mxu0 %v2046
  %v2143 = vpop.f32.mrb[0].mxu0
  %v2144 = vadd.f32 %v2031, %v2143
  %v2145 = vpop.f32.mrb[0].mxu0
  %2146 = vmatprep.mubr.f32.mxu0 0.0
  %2147 = vmatmul.mubr.f32.gmra.mrb[0].mxu0 %v2049
  %v2148 = vpop.f32.mrb[0].mxu0
  %v2149 = vadd.f32 %v2031, %v2148
  %v2150 = vpop.f32.mrb[0].mxu0
  %2151 = vmatprep.mubr.f32.mxu0 0.0
  %2152 = vmatmul.mubr.f32.gmra.mrb[0].mxu0 %v2052
  %v2153 = vpop.f32.mrb[0].mxu0
  %v2154 = vadd.f32 %v2031, %v2153
  %v2155 = vpop.f32.mrb[0].mxu0
  %2156 = vmatprep.mubr.f32.mxu0 0.0
  %2157 = vmatmul.mubr.f32.gmra.mrb[0].mxu0 %v2055
  %v2158 = vpop.f32.mrb[0].mxu0
  %v2159 = vadd.f32 %v2031, %v2158
  %v2160 = vpop.f32.mrb[0].mxu0
  %2161 = vdwg.mxu0
  %vm2162 = vcmask 64512
  %2163 = vst.msk [vmem:[%s12] sm:$0xff] %vm2162, %v2124
  %2164 = vst.msk [vmem:[%s12 + $0x8] sm:$0xff] %vm2162, %v2129
  %2165 = vst.msk [vmem:[%s12 + $0x10] sm:$0xff] %vm2162, %v2134
  %2166 = vst.msk [vmem:[%s12 + $0x18] sm:$0xff] %vm2162, %v2139
  %2167 = vst.msk [vmem:[%s12 + $0x20] sm:$0xff] %vm2162, %v2144
  %2168 = vst.msk [vmem:[%s12 + $0x28] sm:$0xff] %vm2162, %v2149
  %2169 = vst.msk [vmem:[%s12 + $0x30] sm:$0xff] %vm2162, %v2154
  %2170 = vst.msk [vmem:[%s12 + $0x38] sm:$0xff] %vm2162, %v2159
  // Predicated region
  $region50: #{gat_forward.1} parent=0 // pred_check
    _
  $region51: #{gat_forward.1} parent=0 // pred_check_branch
    %2172 = sbr.rel (0) target = $region53
  $region52: #{gat_forward.1} parent=0 // pred_region
    _
  $region53: #{gat_forward.1} parent=0 // pred_fallthru
    _
  // Predicated region
  $region54: #{gat_forward.1} parent=0 // pred_check
    _
  $region55: #{gat_forward.1} parent=0 // pred_check_branch
    %2174 = sbr.rel (0) target = $region57
  $region56: #{gat_forward.1} parent=0 // pred_region
    _
  $region57: #{gat_forward.1} parent=0 // pred_fallthru
    _

</llo_original>
